<compile_context>
chip_gen: v7x
topology: tpu7x:2x2x1
jax: 0.10.0
libtpu: 0.0.40
codegen_flags: <defaults>
</compile_context>

<pallas_src>
import jax
import jax.numpy as jnp
from jax.experimental import pallas as pl
from jax.experimental.pallas import tpu as pltpu

# ---- small synthetic config (stands in for ViT-L/14's 77/768/12x12/768) ----
B = 2            # batch
T = 8            # max_length (context length)
W = 128          # transformer width (lane-dense: multiple of 128)
HEADS = 4
DH = W // HEADS
LAYERS = 2
EMBED = 128      # text_projection output dim (lane-dense)
VOCAB = 64
EPS = 1e-5
M = B * T        # flattened row count

RB = 2           # row blocks (v7x: one per TensorCore); must divide B
B_BLK = B // RB  # batch elements per row block
MB = B_BLK * T   # rows per block
NVEC = 8         # packed per-layer vector rows

assert B % RB == 0 and (MB % 8 == 0 or MB == M)


def _ln(x, w, b):
    """LayerNorm over the last dim (f32 statistics)."""
    mu = jnp.mean(x, axis=-1, keepdims=True)
    var = jnp.mean(jnp.square(x - mu), axis=-1, keepdims=True)
    return (x - mu) * jax.lax.rsqrt(var + EPS) * w + b


def blocks_kernel(x_ref, mask_ref, vec_ref, wqkv_ref, wo_ref, wfc_ref, wpj_ref, o_ref):
    """All CLIP ResidualAttentionBlocks for one row block; one grid step == one layer.

    The activation lives in o_ref: its block index is constant across the layer axis,
    so it stays resident in VMEM for the whole layer loop of this row block.
    """
    l = pl.program_id(1)

    @pl.when(l == 0)
    def _():
        o_ref[...] = x_ref[...]

    x = o_ref[...]                           # [MB, W] f32, resident
    mask = mask_ref[...]                     # [T, T] causal (-1e9 above diag)

    vec = vec_ref[0]                         # [NVEC, 4W] packed LN params + biases
    ln1w, ln1b = vec[0:1, :W], vec[1:2, :W]
    ln2w, ln2b = vec[2:3, :W], vec[3:4, :W]
    bqkv = vec[4:5, :3 * W]
    bo = vec[5:6, :W]
    bfc = vec[6:7, :]
    bpj = vec[7:8, :W]

    # ---- multi-head self attention: x += out_proj(MHA(LN1(x))) ----
    h = _ln(x, ln1w, ln1b)
    qkv = jnp.dot(h.astype(jnp.bfloat16), wqkv_ref[0],
                  preferred_element_type=jnp.float32) + bqkv          # [MB, 3W] f32

    def split_heads(part):
        # [MB, W] columns -> [HEADS * B_BLK, T, DH]; batch index n = head*B_BLK + b
        cols = [qkv[:, part * W + hi * DH: part * W + (hi + 1) * DH]
                for hi in range(HEADS)]                               # HEADS x [MB, DH]
        return jnp.stack(cols, axis=0).reshape(HEADS * B_BLK, T, DH)

    qh = split_heads(0).astype(jnp.bfloat16)
    kh = split_heads(1).astype(jnp.bfloat16)
    vh = split_heads(2).astype(jnp.bfloat16)

    scale = 1.0 / (DH ** 0.5)
    # Batched dot_generals over (HEADS * B_BLK): scores and context in two matmuls.
    s = jnp.einsum('ntd,nsd->nts', qh, kh,
                   preferred_element_type=jnp.float32)                # [H*Bb, T, T]
    s = s * scale + mask[None, :, :]
    mx = jnp.max(s, axis=-1, keepdims=True)
    e = jnp.exp(s - mx)
    p = e * pl.reciprocal(jnp.sum(e, axis=-1, keepdims=True), approx=True)
    ctx = jnp.einsum('nts,nsd->ntd', p.astype(jnp.bfloat16), vh,
                     preferred_element_type=jnp.float32)              # [H*Bb, T, DH]

    # Re-pack heads onto the lane axis (PyTorch concat order) and run ONE K=W out-proj.
    ctx = ctx.reshape(HEADS, MB, DH)
    ctx = jnp.concatenate([ctx[hi] for hi in range(HEADS)], axis=-1)  # [MB, W]
    attn = jnp.dot(ctx.astype(jnp.bfloat16), wo_ref[0],
                   preferred_element_type=jnp.float32) + bo
    x = x + attn

    # ---- MLP with QuickGELU: x += c_proj(gelu(c_fc(LN2(x)))) ----
    h2 = _ln(x, ln2w, ln2b)
    f = jnp.dot(h2.astype(jnp.bfloat16), wfc_ref[0],
                preferred_element_type=jnp.float32) + bfc             # [MB, 4W]
    f = f * jax.nn.sigmoid(1.702 * f)
    mlp = jnp.dot(f.astype(jnp.bfloat16), wpj_ref[0],
                  preferred_element_type=jnp.float32) + bpj           # [MB, W]
    o_ref[...] = x + mlp


def head_kernel(pooled_ref, lnfw_ref, lnfb_ref, proj_ref, o_ref):
    """ln_final -> text_projection -> L2 normalize on the already-pooled [B, W] rows."""
    pooled = _ln(pooled_ref[...], lnfw_ref[...], lnfb_ref[...])
    z = jnp.dot(pooled.astype(jnp.bfloat16), proj_ref[...],
                preferred_element_type=jnp.float32)                   # [B, EMBED]
    inv = jax.lax.rsqrt(jnp.sum(z * z, axis=-1, keepdims=True) + 1e-12)
    o_ref[...] = z * inv                                              # normalize=True


def clip_text_encode(tokens, packed, tables):
    """Equivalent of FrozenCLIPTextEmbedder.forward on already-tokenized input."""
    # --- glue: embedding gather + positional embedding, flatten to [B*T, W] ---
    x = jnp.take(tables['token_embedding'], tokens, axis=0)           # [B, T, W]
    x = (x + tables['positional_embedding'][None, :, :]).reshape(M, W)
    mask = jnp.triu(jnp.full((T, T), -1e9, dtype=jnp.float32), k=1)

    def wspec(*tail):
        nd = len(tail)
        return pl.BlockSpec((1,) + tail, lambda r, l, _n=nd: (l,) + (0,) * _n)

    # At real CLIP scale on v5e/v6e (128 MiB VMEM) wfc/wpj could take
    # pipeline_mode=pl.Buffered(3); keep the default depth 2 for v7x's 64 MiB budget.
    x = pl.pallas_call(
        blocks_kernel,
        out_shape=jax.ShapeDtypeStruct((M, W), jnp.float32),
        grid=(RB, LAYERS),
        in_specs=[
            pl.BlockSpec((MB, W), lambda r, l: (r, 0)),    # x (read only at l == 0)
            pl.BlockSpec((T, T), lambda r, l: (0, 0)),     # causal mask
            wspec(NVEC, 4 * W),                            # packed LN params + biases
            wspec(W, 3 * W),                               # wqkv (in, out) bf16
            wspec(W, W),                                   # wo   (in, out) bf16
            wspec(W, 4 * W),                               # wfc  bf16
            wspec(4 * W, W),                               # wpj  bf16
        ],
        out_specs=pl.BlockSpec((MB, W), lambda r, l: (r, 0)),   # resident across layers
        input_output_aliases={0: 0},                            # x HBM buffer reused
        compiler_params=pltpu.CompilerParams(
            dimension_semantics=("parallel", "arbitrary"),      # row blocks || layers seq
            vmem_limit_bytes=48 * 1024 * 1024),                 # < v7x 64 MiB physical
    )(x, mask, packed['vecs'], packed['wqkv'], packed['wo'],
      packed['wfc'], packed['wpj'])

    # --- glue: EOT pooling as a gather (CLIP pools at the argmax token id == EOT) ---
    # (LayerNorm is per-row, so pool-then-ln_final == ln_final-then-pool.)
    eot = jnp.argmax(tokens, axis=-1)
    pooled = jnp.take_along_axis(x.reshape(B, T, W), eot[:, None, None], axis=1)[:, 0, :]

    z = pl.pallas_call(
        head_kernel,
        out_shape=jax.ShapeDtypeStruct((B, EMBED), jnp.float32),
        in_specs=[pl.BlockSpec(memory_space=pltpu.MemorySpace.VMEM)] * 4,
        out_specs=pl.BlockSpec(memory_space=pltpu.MemorySpace.VMEM),
    )(pooled, tables['ln_final_w'], tables['ln_final_b'], tables['text_projection'])
    return z


def init_params(key):
    """Parameters in the PyTorch layout (nn.Linear weight = (out_features, in_features))."""
    ks = iter(jax.random.split(key, 4 + LAYERS * 4))
    scale = 0.02

    def normal(k, shape, s=scale):
        return (s * jax.random.normal(k, shape)).astype(jnp.float32)

    params = {
        'token_embedding': normal(next(ks), (VOCAB, W)),
        'positional_embedding': normal(next(ks), (T, W)),
        'ln_final_w': jnp.ones((W,), jnp.float32),
        'ln_final_b': jnp.zeros((W,), jnp.float32),
        'text_projection': normal(next(ks), (W, EMBED)),
        'layers': [],
    }
    for _ in range(LAYERS):
        params['layers'].append({
            'ln1_w': jnp.ones((W,), jnp.float32),
            'ln1_b': jnp.zeros((W,), jnp.float32),
            'qkv_w': normal(next(ks), (3 * W, W)),   # attn.in_proj_weight
            'qkv_b': jnp.zeros((3 * W,), jnp.float32),
            'out_w': normal(next(ks), (W, W)),       # attn.out_proj.weight
            'out_b': jnp.zeros((W,), jnp.float32),
            'ln2_w': jnp.ones((W,), jnp.float32),
            'ln2_b': jnp.zeros((W,), jnp.float32),
            'fc_w': normal(next(ks), (4 * W, W)),    # mlp.c_fc.weight
            'fc_b': jnp.zeros((4 * W,), jnp.float32),
            'proj_w': normal(next(ks), (W, 4 * W)),  # mlp.c_proj.weight
            'proj_b': jnp.zeros((W,), jnp.float32),
        })
    return params


def pack_params(params):
    """One-time host-side prep:
       * stack per-layer weights along a leading L axis (single gridded call),
       * pre-transpose nn.Linear weights to (in_features, out_features), cast to bf16,
       * pack the 8 small per-layer vectors into one [L, 8, 4W] f32 slab (one DMA/layer)."""
    L = params['layers']

    def pad_row(v, width=4 * W):
        v = v.reshape(-1).astype(jnp.float32)
        return jnp.zeros((width,), jnp.float32).at[:v.shape[0]].set(v)

    vecs = jnp.stack([
        jnp.stack([pad_row(p['ln1_w']), pad_row(p['ln1_b']),
                   pad_row(p['ln2_w']), pad_row(p['ln2_b']),
                   pad_row(p['qkv_b']), pad_row(p['out_b']),
                   pad_row(p['fc_b']), pad_row(p['proj_b'])])
        for p in L])                                                        # [L, 8, 4W]

    packed = {
        'vecs': vecs,
        'wqkv': jnp.stack([p['qkv_w'].T for p in L]).astype(jnp.bfloat16),  # [L, W, 3W]
        'wo': jnp.stack([p['out_w'].T for p in L]).astype(jnp.bfloat16),    # [L, W, W]
        'wfc': jnp.stack([p['fc_w'].T for p in L]).astype(jnp.bfloat16),    # [L, W, 4W]
        'wpj': jnp.stack([p['proj_w'].T for p in L]).astype(jnp.bfloat16),  # [L, 4W, W]
    }
    tables = {
        'token_embedding': params['token_embedding'],
        'positional_embedding': params['positional_embedding'],
        'ln_final_w': params['ln_final_w'].reshape(1, W),
        'ln_final_b': params['ln_final_b'].reshape(1, W),
        'text_projection': params['text_projection'].astype(jnp.bfloat16),
    }
    return packed, tables


if __name__ == "__main__":
    key = jax.random.PRNGKey(0)
    k_params, k_tok = jax.random.split(key)
    params = init_params(k_params)
    packed, tables = pack_params(params)

    # deterministic "tokenized text": ids in [1, VOCAB-2], EOT (= VOCAB-1) placed per row
    tokens = jax.random.randint(k_tok, (B, T), 1, VOCAB - 1, dtype=jnp.int32)
    tokens = tokens.at[0, T - 1].set(VOCAB - 1)
    tokens = tokens.at[1, T - 3].set(VOCAB - 1)

    z = jax.block_until_ready(clip_text_encode(tokens, packed, tables))

    assert z.shape == (B, EMBED) and z.dtype == jnp.float32
    # rows are unit-norm (normalize=True in the module)
    norms = jnp.linalg.norm(z, axis=1)
    assert bool(jnp.all(jnp.isfinite(z))) and bool(jnp.all(jnp.abs(norms - 1.0) < 1e-4))
    print("KERNEL_OK")
</pallas_src>

<mosaic_0001>
module attributes {stable_mosaic.version = 11 : i64} {
  func.func @blocks_kernel(%arg0: i32, %arg1: i32, %arg2: memref<8x128xf32, #tpu.memory_space<vmem>>, %arg3: memref<8x8xf32, #tpu.memory_space<vmem>>, %arg4: memref<1x8x512xf32, #tpu.memory_space<vmem>>, %arg5: memref<1x128x384xbf16, #tpu.memory_space<vmem>>, %arg6: memref<1x128x128xbf16, #tpu.memory_space<vmem>>, %arg7: memref<1x128x512xbf16, #tpu.memory_space<vmem>>, %arg8: memref<1x512x128xbf16, #tpu.memory_space<vmem>>, %arg9: memref<8x128xf32, #tpu.memory_space<vmem>>) attributes {dimension_semantics = [#tpu.dimension_semantics<parallel>, #tpu.dimension_semantics<arbitrary>], iteration_bounds = array<i64: 2, 2>, scalar_prefetch = 0 : i64, scratch_operands = 0 : i64, tpu.core_type = #tpu.core_type<tc>, window_params = [{transform_indices = @transform_0, window_bounds = array<i64: 8, 128>}, {pipeline_mode = #tpu.pipeline_mode<synchronous>, transform_indices = @transform_1, window_bounds = array<i64: 8, 8>}, {transform_indices = @transform_2, window_bounds = array<i64: 1, 8, 512>}, {transform_indices = @transform_3, window_bounds = array<i64: 1, 128, 384>}, {transform_indices = @transform_4, window_bounds = array<i64: 1, 128, 128>}, {transform_indices = @transform_5, window_bounds = array<i64: 1, 128, 512>}, {transform_indices = @transform_6, window_bounds = array<i64: 1, 512, 128>}, {transform_indices = @transform_7, window_bounds = array<i64: 8, 128>}]} {
    %c0_i32 = arith.constant 0 : i32
    %0 = arith.cmpi eq, %arg1, %c0_i32 : i32
    %1 = arith.extui %0 : i1 to i32
    %c0_i32_0 = arith.constant 0 : i32
    %2 = arith.cmpi ne, %1, %c0_i32_0 : i32
    scf.if %2 {
      %c0_41 = arith.constant 0 : index
      %c0_42 = arith.constant 0 : index
      %151 = vector.load %arg2[%c0_41, %c0_42] : memref<8x128xf32, #tpu.memory_space<vmem>>, vector<8x128xf32>
      %c0_43 = arith.constant 0 : index
      %c0_44 = arith.constant 0 : index
      %152 = vector.load %arg9[%c0_43, %c0_44] : memref<8x128xf32, #tpu.memory_space<vmem>>, vector<8x128xf32>
      tpu.vector_store %arg9[%c0_43, %c0_44], %151 {strides = array<i32>} : memref<8x128xf32, #tpu.memory_space<vmem>>, vector<8x128xf32>,
    } else {
    }
    %c0 = arith.constant 0 : index
    %c0_1 = arith.constant 0 : index
    %3 = vector.load %arg9[%c0, %c0_1] : memref<8x128xf32, #tpu.memory_space<vmem>>, vector<8x128xf32>
    %c0_2 = arith.constant 0 : index
    %c0_3 = arith.constant 0 : index
    %4 = vector.load %arg3[%c0_2, %c0_3] : memref<8x8xf32, #tpu.memory_space<vmem>>, vector<8x8xf32>
    %c0_4 = arith.constant 0 : index
    %c0_5 = arith.constant 0 : index
    %c0_6 = arith.constant 0 : index
    %5 = vector.load %arg4[%c0_4, %c0_5, %c0_6] : memref<1x8x512xf32, #tpu.memory_space<vmem>>, vector<1x8x512xf32>
    %6 = vector.shape_cast %5 : vector<1x8x512xf32> to vector<8x512xf32>
    %7 = vector.extract_strided_slice %6 {offsets = [0, 0], sizes = [1, 128], strides = [1, 1]} : vector<8x512xf32> to vector<1x128xf32>
    %8 = vector.extract_strided_slice %6 {offsets = [1, 0], sizes = [1, 128], strides = [1, 1]} : vector<8x512xf32> to vector<1x128xf32>
    %9 = vector.extract_strided_slice %6 {offsets = [2, 0], sizes = [1, 128], strides = [1, 1]} : vector<8x512xf32> to vector<1x128xf32>
    %10 = vector.extract_strided_slice %6 {offsets = [3, 0], sizes = [1, 128], strides = [1, 1]} : vector<8x512xf32> to vector<1x128xf32>
    %11 = vector.extract_strided_slice %6 {offsets = [4, 0], sizes = [1, 384], strides = [1, 1]} : vector<8x512xf32> to vector<1x384xf32>
    %12 = vector.extract_strided_slice %6 {offsets = [5, 0], sizes = [1, 128], strides = [1, 1]} : vector<8x512xf32> to vector<1x128xf32>
    %13 = vector.extract_strided_slice %6 {offsets = [6, 0], sizes = [1, 512], strides = [1, 1]} : vector<8x512xf32> to vector<1x512xf32>
    %14 = vector.extract_strided_slice %6 {offsets = [7, 0], sizes = [1, 128], strides = [1, 1]} : vector<8x512xf32> to vector<1x128xf32>
    %cst = arith.constant dense<0.000000e+00> : vector<8xf32>
    %15 = vector.multi_reduction <add>, %3, %cst [1] : vector<8x128xf32> to vector<8xf32>
    %16 = vector.shape_cast %15 : vector<8xf32> to vector<8x1xf32>
    %cst_7 = arith.constant 1.280000e+02 : f32
    %17 = vector.broadcast %cst_7 : f32 to vector<8x1xf32>
    %18 = arith.divf %16, %17 : vector<8x1xf32>
    %19 = vector.broadcast %18 : vector<8x1xf32> to vector<8x128xf32>
    %20 = arith.subf %3, %19 : vector<8x128xf32>
    %21 = arith.mulf %20, %20 : vector<8x128xf32>
    %cst_8 = arith.constant dense<0.000000e+00> : vector<8xf32>
    %22 = vector.multi_reduction <add>, %21, %cst_8 [1] : vector<8x128xf32> to vector<8xf32>
    %23 = vector.shape_cast %22 : vector<8xf32> to vector<8x1xf32>
    %cst_9 = arith.constant 1.280000e+02 : f32
    %24 = vector.broadcast %cst_9 : f32 to vector<8x1xf32>
    %25 = arith.divf %23, %24 : vector<8x1xf32>
    %26 = vector.broadcast %18 : vector<8x1xf32> to vector<8x128xf32>
    %27 = arith.subf %3, %26 : vector<8x128xf32>
    %cst_10 = arith.constant 9.99999974E-6 : f32
    %28 = vector.broadcast %cst_10 : f32 to vector<8x1xf32>
    %29 = arith.addf %25, %28 : vector<8x1xf32>
    %30 = math.rsqrt %29 : vector<8x1xf32>
    %31 = vector.broadcast %30 : vector<8x1xf32> to vector<8x128xf32>
    %32 = arith.mulf %27, %31 : vector<8x128xf32>
    %33 = vector.broadcast %7 : vector<1x128xf32> to vector<8x128xf32>
    %34 = arith.mulf %32, %33 : vector<8x128xf32>
    %35 = vector.broadcast %8 : vector<1x128xf32> to vector<8x128xf32>
    %36 = arith.addf %34, %35 : vector<8x128xf32>
    %37 = arith.truncf %36 : vector<8x128xf32> to vector<8x128xbf16>
    %c0_11 = arith.constant 0 : index
    %c0_12 = arith.constant 0 : index
    %c0_13 = arith.constant 0 : index
    %38 = vector.load %arg5[%c0_11, %c0_12, %c0_13] : memref<1x128x384xbf16, #tpu.memory_space<vmem>>, vector<1x128x384xbf16>
    %39 = vector.shape_cast %38 : vector<1x128x384xbf16> to vector<128x384xbf16>
    %cst_14 = arith.constant dense<0.000000e+00> : vector<8x384xf32>
    %40 = tpu.matmul %37, %39, %cst_14 {dimension_numbers = #tpu.dot_dimension_numbers<[1], [0], [0], [1], [0, 0, 1, 1], [], []>} : vector<8x128xbf16>, vector<128x384xbf16>, vector<8x384xf32> -> vector<8x384xf32>
    %41 = vector.broadcast %11 : vector<1x384xf32> to vector<8x384xf32>
    %42 = arith.addf %40, %41 : vector<8x384xf32>
    %43 = vector.extract_strided_slice %42 {offsets = [0, 0], sizes = [8, 32], strides = [1, 1]} : vector<8x384xf32> to vector<8x32xf32>
    %44 = vector.extract_strided_slice %42 {offsets = [0, 32], sizes = [8, 32], strides = [1, 1]} : vector<8x384xf32> to vector<8x32xf32>
    %45 = vector.extract_strided_slice %42 {offsets = [0, 64], sizes = [8, 32], strides = [1, 1]} : vector<8x384xf32> to vector<8x32xf32>
    %46 = vector.extract_strided_slice %42 {offsets = [0, 96], sizes = [8, 32], strides = [1, 1]} : vector<8x384xf32> to vector<8x32xf32>
    %47 = vector.shape_cast %43 : vector<8x32xf32> to vector<1x8x32xf32>
    %48 = vector.shape_cast %44 : vector<8x32xf32> to vector<1x8x32xf32>
    %49 = vector.shape_cast %45 : vector<8x32xf32> to vector<1x8x32xf32>
    %50 = vector.shape_cast %46 : vector<8x32xf32> to vector<1x8x32xf32>
    %51 = tpu.concatenate %47, %48, %49, %50 in 0 : vector<1x8x32xf32>, vector<1x8x32xf32>, vector<1x8x32xf32>, vector<1x8x32xf32> -> vector<4x8x32xf32>
    %52 = arith.truncf %51 : vector<4x8x32xf32> to vector<4x8x32xbf16>
    %53 = vector.extract_strided_slice %42 {offsets = [0, 128], sizes = [8, 32], strides = [1, 1]} : vector<8x384xf32> to vector<8x32xf32>
    %54 = vector.extract_strided_slice %42 {offsets = [0, 160], sizes = [8, 32], strides = [1, 1]} : vector<8x384xf32> to vector<8x32xf32>
    %55 = vector.extract_strided_slice %42 {offsets = [0, 192], sizes = [8, 32], strides = [1, 1]} : vector<8x384xf32> to vector<8x32xf32>
    %56 = vector.extract_strided_slice %42 {offsets = [0, 224], sizes = [8, 32], strides = [1, 1]} : vector<8x384xf32> to vector<8x32xf32>
    %57 = vector.shape_cast %53 : vector<8x32xf32> to vector<1x8x32xf32>
    %58 = vector.shape_cast %54 : vector<8x32xf32> to vector<1x8x32xf32>
    %59 = vector.shape_cast %55 : vector<8x32xf32> to vector<1x8x32xf32>
    %60 = vector.shape_cast %56 : vector<8x32xf32> to vector<1x8x32xf32>
    %61 = tpu.concatenate %57, %58, %59, %60 in 0 : vector<1x8x32xf32>, vector<1x8x32xf32>, vector<1x8x32xf32>, vector<1x8x32xf32> -> vector<4x8x32xf32>
    %62 = arith.truncf %61 : vector<4x8x32xf32> to vector<4x8x32xbf16>
    %63 = vector.extract_strided_slice %42 {offsets = [0, 256], sizes = [8, 32], strides = [1, 1]} : vector<8x384xf32> to vector<8x32xf32>
    %64 = vector.extract_strided_slice %42 {offsets = [0, 288], sizes = [8, 32], strides = [1, 1]} : vector<8x384xf32> to vector<8x32xf32>
    %65 = vector.extract_strided_slice %42 {offsets = [0, 320], sizes = [8, 32], strides = [1, 1]} : vector<8x384xf32> to vector<8x32xf32>
    %66 = vector.extract_strided_slice %42 {offsets = [0, 352], sizes = [8, 32], strides = [1, 1]} : vector<8x384xf32> to vector<8x32xf32>
    %67 = vector.shape_cast %63 : vector<8x32xf32> to vector<1x8x32xf32>
    %68 = vector.shape_cast %64 : vector<8x32xf32> to vector<1x8x32xf32>
    %69 = vector.shape_cast %65 : vector<8x32xf32> to vector<1x8x32xf32>
    %70 = vector.shape_cast %66 : vector<8x32xf32> to vector<1x8x32xf32>
    %71 = tpu.concatenate %67, %68, %69, %70 in 0 : vector<1x8x32xf32>, vector<1x8x32xf32>, vector<1x8x32xf32>, vector<1x8x32xf32> -> vector<4x8x32xf32>
    %72 = arith.truncf %71 : vector<4x8x32xf32> to vector<4x8x32xbf16>
    "tpu.trace_start"() <{level = 10 : i32, message = "ntd,nsd->nts"}> : () -> ()
    %cst_15 = arith.constant dense<0.000000e+00> : vector<4x8x8xf32>
    %73 = tpu.matmul %52, %62, %cst_15 {dimension_numbers = #tpu.dot_dimension_numbers<[2], [2], [1], [1], [0, 0, 0, 1, 1, 1], [0], [0]>} : vector<4x8x32xbf16>, vector<4x8x32xbf16>, vector<4x8x8xf32> -> vector<4x8x8xf32>
    "tpu.trace_stop"() : () -> ()
    %cst_16 = arith.constant 0.176776692 : f32
    %74 = vector.broadcast %cst_16 : f32 to vector<4x8x8xf32>
    %75 = arith.mulf %73, %74 : vector<4x8x8xf32>
    %76 = vector.shape_cast %4 : vector<8x8xf32> to vector<1x8x8xf32>
    %77 = vector.broadcast %76 : vector<1x8x8xf32> to vector<4x8x8xf32>
    %78 = arith.addf %75, %77 : vector<4x8x8xf32>
    %cst_17 = arith.constant dense<0xFF800000> : vector<4x8xf32>
    %79 = vector.multi_reduction <maximumf>, %78, %cst_17 [2] : vector<4x8x8xf32> to vector<4x8xf32>
    %80 = vector.shape_cast %79 : vector<4x8xf32> to vector<4x8x1xf32>
    %81 = vector.broadcast %80 : vector<4x8x1xf32> to vector<4x8x8xf32>
    %82 = arith.subf %78, %81 : vector<4x8x8xf32>
    %83 = math.exp %82 : vector<4x8x8xf32>
    %cst_18 = arith.constant dense<0.000000e+00> : vector<4x8xf32>
    %84 = vector.multi_reduction <add>, %83, %cst_18 [2] : vector<4x8x8xf32> to vector<4x8xf32>
    %85 = vector.shape_cast %84 : vector<4x8xf32> to vector<4x8x1xf32>
    %86 = tpu.reciprocal %85 {approx = true} : vector<4x8x1xf32> -> vector<4x8x1xf32>
    %87 = vector.broadcast %86 : vector<4x8x1xf32> to vector<4x8x8xf32>
    %88 = arith.mulf %83, %87 : vector<4x8x8xf32>
    %89 = arith.truncf %88 : vector<4x8x8xf32> to vector<4x8x8xbf16>
    "tpu.trace_start"() <{level = 10 : i32, message = "nts,nsd->ntd"}> : () -> ()
    %cst_19 = arith.constant dense<0.000000e+00> : vector<4x8x32xf32>
    %90 = tpu.matmul %89, %72, %cst_19 {dimension_numbers = #tpu.dot_dimension_numbers<[2], [1], [1], [2], [0, 0, 0, 1, 1, 2], [0], [0]>} : vector<4x8x8xbf16>, vector<4x8x32xbf16>, vector<4x8x32xf32> -> vector<4x8x32xf32>
    "tpu.trace_stop"() : () -> ()
    %91 = vector.extract_strided_slice %90 {offsets = [0, 0, 0], sizes = [1, 8, 32], strides = [1, 1, 1]} : vector<4x8x32xf32> to vector<1x8x32xf32>
    %92 = vector.shape_cast %91 : vector<1x8x32xf32> to vector<8x32xf32>
    %93 = vector.extract_strided_slice %90 {offsets = [1, 0, 0], sizes = [1, 8, 32], strides = [1, 1, 1]} : vector<4x8x32xf32> to vector<1x8x32xf32>
    %94 = vector.shape_cast %93 : vector<1x8x32xf32> to vector<8x32xf32>
    %95 = vector.extract_strided_slice %90 {offsets = [2, 0, 0], sizes = [1, 8, 32], strides = [1, 1, 1]} : vector<4x8x32xf32> to vector<1x8x32xf32>
    %96 = vector.shape_cast %95 : vector<1x8x32xf32> to vector<8x32xf32>
    %97 = vector.extract_strided_slice %90 {offsets = [3, 0, 0], sizes = [1, 8, 32], strides = [1, 1, 1]} : vector<4x8x32xf32> to vector<1x8x32xf32>
    %98 = vector.shape_cast %97 : vector<1x8x32xf32> to vector<8x32xf32>
    %99 = tpu.concatenate %92, %94, %96, %98 in 1 : vector<8x32xf32>, vector<8x32xf32>, vector<8x32xf32>, vector<8x32xf32> -> vector<8x128xf32>
    %100 = arith.truncf %99 : vector<8x128xf32> to vector<8x128xbf16>
    %c0_20 = arith.constant 0 : index
    %c0_21 = arith.constant 0 : index
    %c0_22 = arith.constant 0 : index
    %101 = vector.load %arg6[%c0_20, %c0_21, %c0_22] : memref<1x128x128xbf16, #tpu.memory_space<vmem>>, vector<1x128x128xbf16>
    %102 = vector.shape_cast %101 : vector<1x128x128xbf16> to vector<128x128xbf16>
    %cst_23 = arith.constant dense<0.000000e+00> : vector<8x128xf32>
    %103 = tpu.matmul %100, %102, %cst_23 {dimension_numbers = #tpu.dot_dimension_numbers<[1], [0], [0], [1], [0, 0, 1, 1], [], []>} : vector<8x128xbf16>, vector<128x128xbf16>, vector<8x128xf32> -> vector<8x128xf32>
    %104 = vector.broadcast %12 : vector<1x128xf32> to vector<8x128xf32>
    %105 = arith.addf %103, %104 : vector<8x128xf32>
    %106 = arith.addf %3, %105 : vector<8x128xf32>
    %cst_24 = arith.constant dense<0.000000e+00> : vector<8xf32>
    %107 = vector.multi_reduction <add>, %106, %cst_24 [1] : vector<8x128xf32> to vector<8xf32>
    %108 = vector.shape_cast %107 : vector<8xf32> to vector<8x1xf32>
    %cst_25 = arith.constant 1.280000e+02 : f32
    %109 = vector.broadcast %cst_25 : f32 to vector<8x1xf32>
    %110 = arith.divf %108, %109 : vector<8x1xf32>
    %111 = vector.broadcast %110 : vector<8x1xf32> to vector<8x128xf32>
    %112 = arith.subf %106, %111 : vector<8x128xf32>
    %113 = arith.mulf %112, %112 : vector<8x128xf32>
    %cst_26 = arith.constant dense<0.000000e+00> : vector<8xf32>
    %114 = vector.multi_reduction <add>, %113, %cst_26 [1] : vector<8x128xf32> to vector<8xf32>
    %115 = vector.shape_cast %114 : vector<8xf32> to vector<8x1xf32>
    %cst_27 = arith.constant 1.280000e+02 : f32
    %116 = vector.broadcast %cst_27 : f32 to vector<8x1xf32>
    %117 = arith.divf %115, %116 : vector<8x1xf32>
    %118 = vector.broadcast %110 : vector<8x1xf32> to vector<8x128xf32>
    %119 = arith.subf %106, %118 : vector<8x128xf32>
    %cst_28 = arith.constant 9.99999974E-6 : f32
    %120 = vector.broadcast %cst_28 : f32 to vector<8x1xf32>
    %121 = arith.addf %117, %120 : vector<8x1xf32>
    %122 = math.rsqrt %121 : vector<8x1xf32>
    %123 = vector.broadcast %122 : vector<8x1xf32> to vector<8x128xf32>
    %124 = arith.mulf %119, %123 : vector<8x128xf32>
    %125 = vector.broadcast %9 : vector<1x128xf32> to vector<8x128xf32>
    %126 = arith.mulf %124, %125 : vector<8x128xf32>
    %127 = vector.broadcast %10 : vector<1x128xf32> to vector<8x128xf32>
    %128 = arith.addf %126, %127 : vector<8x128xf32>
    %129 = arith.truncf %128 : vector<8x128xf32> to vector<8x128xbf16>
    %c0_29 = arith.constant 0 : index
    %c0_30 = arith.constant 0 : index
    %c0_31 = arith.constant 0 : index
    %130 = vector.load %arg7[%c0_29, %c0_30, %c0_31] : memref<1x128x512xbf16, #tpu.memory_space<vmem>>, vector<1x128x512xbf16>
    %131 = vector.shape_cast %130 : vector<1x128x512xbf16> to vector<128x512xbf16>
    %cst_32 = arith.constant dense<0.000000e+00> : vector<8x512xf32>
    %132 = tpu.matmul %129, %131, %cst_32 {dimension_numbers = #tpu.dot_dimension_numbers<[1], [0], [0], [1], [0, 0, 1, 1], [], []>} : vector<8x128xbf16>, vector<128x512xbf16>, vector<8x512xf32> -> vector<8x512xf32>
    %133 = vector.broadcast %13 : vector<1x512xf32> to vector<8x512xf32>
    %134 = arith.addf %132, %133 : vector<8x512xf32>
    %cst_33 = arith.constant 1.702000e+00 : f32
    %135 = vector.broadcast %cst_33 : f32 to vector<8x512xf32>
    %136 = arith.mulf %135, %134 : vector<8x512xf32>
    %137 = arith.negf %136 : vector<8x512xf32>
    %138 = math.exp %137 : vector<8x512xf32>
    %cst_34 = arith.constant 1.000000e+00 : f32
    %139 = vector.broadcast %cst_34 : f32 to vector<8x512xf32>
    %140 = arith.addf %139, %138 : vector<8x512xf32>
    %141 = arith.divf %139, %140 : vector<8x512xf32>
    %142 = arith.mulf %134, %141 : vector<8x512xf32>
    %143 = arith.truncf %142 : vector<8x512xf32> to vector<8x512xbf16>
    %c0_35 = arith.constant 0 : index
    %c0_36 = arith.constant 0 : index
    %c0_37 = arith.constant 0 : index
    %144 = vector.load %arg8[%c0_35, %c0_36, %c0_37] : memref<1x512x128xbf16, #tpu.memory_space<vmem>>, vector<1x512x128xbf16>
    %145 = vector.shape_cast %144 : vector<1x512x128xbf16> to vector<512x128xbf16>
    %cst_38 = arith.constant dense<0.000000e+00> : vector<8x128xf32>
    %146 = tpu.matmul %143, %145, %cst_38 {dimension_numbers = #tpu.dot_dimension_numbers<[1], [0], [0], [1], [0, 0, 1, 1], [], []>} : vector<8x512xbf16>, vector<512x128xbf16>, vector<8x128xf32> -> vector<8x128xf32>
    %147 = vector.broadcast %14 : vector<1x128xf32> to vector<8x128xf32>
    %148 = arith.addf %146, %147 : vector<8x128xf32>
    %149 = arith.addf %106, %148 : vector<8x128xf32>
    %c0_39 = arith.constant 0 : index
    %c0_40 = arith.constant 0 : index
    %150 = vector.load %arg9[%c0_39, %c0_40] : memref<8x128xf32, #tpu.memory_space<vmem>>, vector<8x128xf32>
    tpu.vector_store %arg9[%c0_39, %c0_40], %149 {strides = array<i32>} : memref<8x128xf32, #tpu.memory_space<vmem>>, vector<8x128xf32>,
    return
  }
  func.func @transform_0(%arg0: i32, %arg1: i32) -> (i32, i32) {
    %c0_i32 = arith.constant 0 : i32
    %c0_i32_0 = arith.constant 0 : i32
    return %arg0, %c0_i32 : i32, i32
  }
  func.func @transform_1(%arg0: i32, %arg1: i32) -> (i32, i32) {
    %c0_i32 = arith.constant 0 : i32
    %c0_i32_0 = arith.constant 0 : i32
    %c0_i32_1 = arith.constant 0 : i32
    return %c0_i32, %c0_i32_0 : i32, i32
  }
  func.func @transform_2(%arg0: i32, %arg1: i32) -> (i32, i32, i32) {
    %c0_i32 = arith.constant 0 : i32
    %c0_i32_0 = arith.constant 0 : i32
    %c0_i32_1 = arith.constant 0 : i32
    return %arg1, %c0_i32, %c0_i32_0 : i32, i32, i32
  }
  func.func @transform_3(%arg0: i32, %arg1: i32) -> (i32, i32, i32) {
    %c0_i32 = arith.constant 0 : i32
    %c0_i32_0 = arith.constant 0 : i32
    %c0_i32_1 = arith.constant 0 : i32
    return %arg1, %c0_i32, %c0_i32_0 : i32, i32, i32
  }
  func.func @transform_4(%arg0: i32, %arg1: i32) -> (i32, i32, i32) {
    %c0_i32 = arith.constant 0 : i32
    %c0_i32_0 = arith.constant 0 : i32
    %c0_i32_1 = arith.constant 0 : i32
    return %arg1, %c0_i32, %c0_i32_0 : i32, i32, i32
  }
  func.func @transform_5(%arg0: i32, %arg1: i32) -> (i32, i32, i32) {
    %c0_i32 = arith.constant 0 : i32
    %c0_i32_0 = arith.constant 0 : i32
    %c0_i32_1 = arith.constant 0 : i32
    return %arg1, %c0_i32, %c0_i32_0 : i32, i32, i32
  }
  func.func @transform_6(%arg0: i32, %arg1: i32) -> (i32, i32, i32) {
    %c0_i32 = arith.constant 0 : i32
    %c0_i32_0 = arith.constant 0 : i32
    %c0_i32_1 = arith.constant 0 : i32
    return %arg1, %c0_i32, %c0_i32_0 : i32, i32, i32
  }
  func.func @transform_7(%arg0: i32, %arg1: i32) -> (i32, i32) {
    %c0_i32 = arith.constant 0 : i32
    %c0_i32_0 = arith.constant 0 : i32
    return %arg0, %c0_i32 : i32, i32
  }
}

</mosaic_0001>

<llo_original>
// kernel: tpu_custom_call.1
$region0: #{tpu_custom_call.1}
  #allocation0 [shape = 'u32[]', space=smem, size = 0x4, offset = 0x4, fixed_abs, tag = 'smem constant byte address 0x4 - core index']
  #allocation1 [shape = 'u32[144,128]{1,0:T(1,128)}', space=vmem, size = 0x12000, scoped, tag = 'internal scratch']
  %s0 = inlined_call_operand.hbm [shape: f32[16,128], index: 0, kind: input, shape index: {}, may-alias: {0,7}]
  %s1 = inlined_call_operand.vmem [shape: f32[8,8], index: 1, kind: input, shape index: {}]
  %s2 = inlined_call_operand.hbm [shape: f32[2,8,512], index: 2, kind: input, shape index: {}]
  %s3 = inlined_call_operand.hbm [shape: bf16[2,128,384], index: 3, kind: input, shape index: {}]
  %s4 = inlined_call_operand.hbm [shape: bf16[2,128,128], index: 4, kind: input, shape index: {}]
  %s5 = inlined_call_operand.hbm [shape: bf16[2,128,512], index: 5, kind: input, shape index: {}]
  %s6 = inlined_call_operand.hbm [shape: bf16[2,512,128], index: 6, kind: input, shape index: {}]
  %s7 = inlined_call_operand.hbm [shape: f32[16,128], index: 7, kind: output, shape index: {}, may-alias: {0,7}]
  %s8 = sld [smem:[#allocation0]]
  $region89: #{tpu_custom_call.1} parent=0
    _
  %s10 = ssub.s32 1, %s8
  %s11 = scalar_select 0, %s10, %s8
  $region1: #{tpu_custom_call.1} parent=0
    #allocation2 [shape = 'u8[8192]{0}', space=vmem, size = 0x2000, scoped, tag = 'input window, operand 0']
    #allocation3 [shape = 's32[2]{0}', space=sflag, size = 0x8, scoped, tag = 'scoped memory for tpu_custom_call.1']
    #allocation4 [shape = 's32[2]{0}', space=sflag, size = 0x8, scoped, tag = 'scoped memory for tpu_custom_call.1']
    #allocation5 [shape = 'u8[32768]{0}', space=vmem, size = 0x8000, scoped, tag = 'input window, operand 2']
    #allocation6 [shape = 's32[2]{0}', space=sflag, size = 0x8, scoped, tag = 'scoped memory for tpu_custom_call.1']
    #allocation7 [shape = 'u8[196608]{0}', space=vmem, size = 0x30000, scoped, tag = 'input window, operand 3']
    #allocation8 [shape = 'u8[65536]{0}', space=vmem, size = 0x10000, scoped, tag = 'input window, operand 4']
    #allocation9 [shape = 's32[2]{0}', space=sflag, size = 0x8, scoped, tag = 'scoped memory for tpu_custom_call.1']
    #allocation10 [shape = 'u8[262144]{0}', space=vmem, size = 0x40000, scoped, tag = 'input window, operand 5']
    #allocation11 [shape = 'u8[262144]{0}', space=vmem, size = 0x40000, scoped, tag = 'input window, operand 6']
    #allocation12 [shape = 's32[2]{0}', space=sflag, size = 0x8, scoped, tag = 'scoped memory for tpu_custom_call.1']
    #allocation13 [shape = 'u8[8192]{0}', space=vmem, size = 0x2000, scoped, tag = 'output window, operand 0']
    %12 = vsyncpa [#allocation3], 0
    %s13 = scalar_lea.sflag [#allocation3], 1
    %14 = vsyncpa %s13, 0
    %15 = vsyncpa [#allocation6], 0
    %s16 = scalar_lea.sflag [#allocation6], 1
    %17 = vsyncpa %s16, 0
    %18 = vsyncpa [#allocation9], 0
    %s19 = scalar_lea.sflag [#allocation9], 1
    %20 = vsyncpa %s19, 0
    %21 = vsyncpa [#allocation12], 0
    %s22 = scalar_lea.sflag [#allocation12], 1
    %23 = vsyncpa %s22, 0
    %24 = vsyncpa [#allocation4], 0
    %s25 = scalar_lea.sflag [#allocation4], 1
    %26 = vsyncpa %s25, 0
    loop: start=0, step=1, limit=6
    $region2: #{tpu_custom_call.1} parent=1 // loop_pre_header
      _
    $region3: #{tpu_custom_call.1} parent=1 // loop_header
      %s28 = sphi 0, %s32
      %p29 = scmp.ge.s32.totalorder %s28, 6
      %s35 = sphi 0, %s47
      %s36 = sphi 0, %s43
      %s37 = sphi 0, %s35
      %s38 = sphi 0, %s36
      %s39 = sphi 0, %s37
      %s40 = sphi 0, %s38
      %s50 = sphi 0, %s52
      %s53 = sphi 0, %s50
      %s54 = sphi 0, %s53
      %s70 = sphi 0, %s54
      %s74 = sphi 0, %s74
      %s76 = sphi 0, %s74
      %s77 = sphi 0, %s76
      %s91 = sphi 0, %s77
      %s97 = sphi 0, %s99
      %s100 = sphi 0, %s97
      %s101 = sphi 0, %s100
      %s117 = sphi 0, %s101
      %s123 = sphi 0, %s125
      %s126 = sphi 0, %s123
      %s127 = sphi 0, %s126
      %s143 = sphi 0, %s127
      %s149 = sphi 0, %s151
      %s152 = sphi 0, %s149
      %s153 = sphi 0, %s152
      %s169 = sphi 0, %s153
      %s175 = sphi 0, %s177
      %s178 = sphi 0, %s175
      %s179 = sphi 0, %s178
      %s195 = sphi 0, %s179
      %s201 = sphi 0, %s203
      %s204 = sphi 0, %s201
      %s205 = sphi 0, %s204
      %s221 = sphi 0, %s205
      %s227 = sphi 0, %s229
      %s230 = sphi 0, %s227
      %s231 = sphi 0, %s230
      %s247 = sphi 0, %s231
    $region4: #{tpu_custom_call.1} parent=1 // loop_header_branch
      %31 = sbr.rel (%p29) target = $region8
    $region5: #{tpu_custom_call.1} parent=1 // loop_body
      %s33 = ssub.s32 %s28, 1
      %s34 = ssub.s32 %s28, 2
      %s41 = sadd.s32 1, %s36
      %p42 = scmp.ge.s32.totalorder %s41, 2
      %s43 = scalar_select %p42, 0, %s41
      %s44 = sadd.s32 1, %s35
      %s45 = scalar_select %p42, %s44, %s35
      %p46 = scmp.ge.s32.totalorder %s45, 2
      %s47 = scalar_select %p46, 0, %s45
      %s48 = ssub.s32 %s35, %s47
      %p49 = scmp.eq.s32.totalorder %s48, 0
      %s51 = sadd.s32 %s50, 1
      %s52 = scalar_select %p49, %s50, %s51
      %p55 = pneg %p49
      %p56 = scmp.eq.s32.totalorder %s28, 3
      %p57 = por %p55, %p56
      %p58 = scmp.ne.s32.totalorder %s50, %s53
      %p59 = scmp.eq.s32.totalorder %s28, 0
      %p60 = por %p58, %p59
      %p61 = scmp.ne.s32.totalorder %s50, %s53
      %p62 = scmp.eq.s32.totalorder %s33, 3
      %p63 = por %p61, %p62
      %p64 = scmp.ne.s32.totalorder %s53, %s54
      %p65 = scmp.eq.s32.totalorder %s33, 0
      %p66 = por %p64, %p65
      %p67 = scmp.ne.s32.totalorder %s53, %s54
      %p68 = scmp.eq.s32.totalorder %s34, 3
      %p69 = por %p67, %p68
      %p71 = scmp.ne.s32.totalorder %s54, %s70
      %p72 = scmp.eq.s32.totalorder %s34, 0
      %p73 = por %p71, %p72
      %s75 = sadd.s32 %s74, 1
      %p78 = scmp.eq.s32.totalorder %s28, 3
      %p79 = scmp.ne.s32.totalorder %s74, %s76
      %p80 = scmp.eq.s32.totalorder %s28, 0
      %p81 = por %p79, %p80
      %p82 = scmp.ne.s32.totalorder %s74, %s76
      %p83 = scmp.eq.s32.totalorder %s33, 3
      %p84 = por %p82, %p83
      %p85 = scmp.ne.s32.totalorder %s76, %s77
      %p86 = scmp.eq.s32.totalorder %s33, 0
      %p87 = por %p85, %p86
      %p88 = scmp.ne.s32.totalorder %s76, %s77
      %p89 = scmp.eq.s32.totalorder %s34, 3
      %p90 = por %p88, %p89
      %p92 = scmp.ne.s32.totalorder %s77, %s91
      %p93 = scmp.eq.s32.totalorder %s34, 0
      %p94 = por %p92, %p93
      %s95 = ssub.s32 %s36, %s43
      %p96 = scmp.eq.s32.totalorder %s95, 0
      %s98 = sadd.s32 %s97, 1
      %s99 = scalar_select %p96, %s97, %s98
      %p102 = pneg %p96
      %p103 = scmp.eq.s32.totalorder %s28, 3
      %p104 = por %p102, %p103
      %p105 = scmp.ne.s32.totalorder %s97, %s100
      %p106 = scmp.eq.s32.totalorder %s28, 0
      %p107 = por %p105, %p106
      %p108 = scmp.ne.s32.totalorder %s97, %s100
      %p109 = scmp.eq.s32.totalorder %s33, 3
      %p110 = por %p108, %p109
      %p111 = scmp.ne.s32.totalorder %s100, %s101
      %p112 = scmp.eq.s32.totalorder %s33, 0
      %p113 = por %p111, %p112
      %p114 = scmp.ne.s32.totalorder %s100, %s101
      %p115 = scmp.eq.s32.totalorder %s34, 3
      %p116 = por %p114, %p115
      %p118 = scmp.ne.s32.totalorder %s101, %s117
      %p119 = scmp.eq.s32.totalorder %s34, 0
      %p120 = por %p118, %p119
      %s121 = ssub.s32 %s36, %s43
      %p122 = scmp.eq.s32.totalorder %s121, 0
      %s124 = sadd.s32 %s123, 1
      %s125 = scalar_select %p122, %s123, %s124
      %p128 = pneg %p122
      %p129 = scmp.eq.s32.totalorder %s28, 3
      %p130 = por %p128, %p129
      %p131 = scmp.ne.s32.totalorder %s123, %s126
      %p132 = scmp.eq.s32.totalorder %s28, 0
      %p133 = por %p131, %p132
      %p134 = scmp.ne.s32.totalorder %s123, %s126
      %p135 = scmp.eq.s32.totalorder %s33, 3
      %p136 = por %p134, %p135
      %p137 = scmp.ne.s32.totalorder %s126, %s127
      %p138 = scmp.eq.s32.totalorder %s33, 0
      %p139 = por %p137, %p138
      %p140 = scmp.ne.s32.totalorder %s126, %s127
      %p141 = scmp.eq.s32.totalorder %s34, 3
      %p142 = por %p140, %p141
      %p144 = scmp.ne.s32.totalorder %s127, %s143
      %p145 = scmp.eq.s32.totalorder %s34, 0
      %p146 = por %p144, %p145
      %s147 = ssub.s32 %s36, %s43
      %p148 = scmp.eq.s32.totalorder %s147, 0
      %s150 = sadd.s32 %s149, 1
      %s151 = scalar_select %p148, %s149, %s150
      %p154 = pneg %p148
      %p155 = scmp.eq.s32.totalorder %s28, 3
      %p156 = por %p154, %p155
      %p157 = scmp.ne.s32.totalorder %s149, %s152
      %p158 = scmp.eq.s32.totalorder %s28, 0
      %p159 = por %p157, %p158
      %p160 = scmp.ne.s32.totalorder %s149, %s152
      %p161 = scmp.eq.s32.totalorder %s33, 3
      %p162 = por %p160, %p161
      %p163 = scmp.ne.s32.totalorder %s152, %s153
      %p164 = scmp.eq.s32.totalorder %s33, 0
      %p165 = por %p163, %p164
      %p166 = scmp.ne.s32.totalorder %s152, %s153
      %p167 = scmp.eq.s32.totalorder %s34, 3
      %p168 = por %p166, %p167
      %p170 = scmp.ne.s32.totalorder %s153, %s169
      %p171 = scmp.eq.s32.totalorder %s34, 0
      %p172 = por %p170, %p171
      %s173 = ssub.s32 %s36, %s43
      %p174 = scmp.eq.s32.totalorder %s173, 0
      %s176 = sadd.s32 %s175, 1
      %s177 = scalar_select %p174, %s175, %s176
      %p180 = pneg %p174
      %p181 = scmp.eq.s32.totalorder %s28, 3
      %p182 = por %p180, %p181
      %p183 = scmp.ne.s32.totalorder %s175, %s178
      %p184 = scmp.eq.s32.totalorder %s28, 0
      %p185 = por %p183, %p184
      %p186 = scmp.ne.s32.totalorder %s175, %s178
      %p187 = scmp.eq.s32.totalorder %s33, 3
      %p188 = por %p186, %p187
      %p189 = scmp.ne.s32.totalorder %s178, %s179
      %p190 = scmp.eq.s32.totalorder %s33, 0
      %p191 = por %p189, %p190
      %p192 = scmp.ne.s32.totalorder %s178, %s179
      %p193 = scmp.eq.s32.totalorder %s34, 3
      %p194 = por %p192, %p193
      %p196 = scmp.ne.s32.totalorder %s179, %s195
      %p197 = scmp.eq.s32.totalorder %s34, 0
      %p198 = por %p196, %p197
      %s199 = ssub.s32 %s36, %s43
      %p200 = scmp.eq.s32.totalorder %s199, 0
      %s202 = sadd.s32 %s201, 1
      %s203 = scalar_select %p200, %s201, %s202
      %p206 = pneg %p200
      %p207 = scmp.eq.s32.totalorder %s28, 3
      %p208 = por %p206, %p207
      %p209 = scmp.ne.s32.totalorder %s201, %s204
      %p210 = scmp.eq.s32.totalorder %s28, 0
      %p211 = por %p209, %p210
      %p212 = scmp.ne.s32.totalorder %s201, %s204
      %p213 = scmp.eq.s32.totalorder %s33, 3
      %p214 = por %p212, %p213
      %p215 = scmp.ne.s32.totalorder %s204, %s205
      %p216 = scmp.eq.s32.totalorder %s33, 0
      %p217 = por %p215, %p216
      %p218 = scmp.ne.s32.totalorder %s204, %s205
      %p219 = scmp.eq.s32.totalorder %s34, 3
      %p220 = por %p218, %p219
      %p222 = scmp.ne.s32.totalorder %s205, %s221
      %p223 = scmp.eq.s32.totalorder %s34, 0
      %p224 = por %p222, %p223
      %s225 = ssub.s32 %s35, %s47
      %p226 = scmp.eq.s32.totalorder %s225, 0
      %s228 = sadd.s32 %s227, 1
      %s229 = scalar_select %p226, %s227, %s228
      %p232 = pneg %p226
      %p233 = scmp.eq.s32.totalorder %s28, 3
      %p234 = por %p232, %p233
      %p235 = scmp.ne.s32.totalorder %s227, %s230
      %p236 = scmp.eq.s32.totalorder %s28, 0
      %p237 = por %p235, %p236
      %p238 = scmp.ne.s32.totalorder %s227, %s230
      %p239 = scmp.eq.s32.totalorder %s33, 3
      %p240 = por %p238, %p239
      %p241 = scmp.ne.s32.totalorder %s230, %s231
      %p242 = scmp.eq.s32.totalorder %s33, 0
      %p243 = por %p241, %p242
      %p244 = scmp.ne.s32.totalorder %s230, %s231
      %p245 = scmp.eq.s32.totalorder %s34, 3
      %p246 = por %p244, %p245
      %p248 = scmp.ne.s32.totalorder %s231, %s247
      %p249 = scmp.eq.s32.totalorder %s34, 0
      %p250 = por %p248, %p249
      %p251 = scmp.le.s32.totalorder 1, %s28
      %p252 = scmp.lt.s32.totalorder %s28, 5
      %p253 = pnand %p251, %p252
      %p254 = pneg %p253
      // Predicated region
      $region9: #{tpu_custom_call.1} parent=5 // pred_check
        _
      $region10: #{tpu_custom_call.1} parent=5 // pred_check_branch
        %256 = sbr.rel (%p253) target = $region12
      $region11: #{tpu_custom_call.1} parent=5 // pred_region
        %s257 = ssub.s32 %s28, 1
        // Predicated region
        $region13: #{tpu_custom_call.1} parent=11 // pred_check
          %p258 = pneg %p87
        $region14: #{tpu_custom_call.1} parent=11 // pred_check_branch
          %260 = sbr.rel (%p258) target = $region16
        $region15: #{tpu_custom_call.1} parent=11 // pred_region
          _
        $region16: #{tpu_custom_call.1} parent=11 // pred_fallthru
          _
      $region12: #{tpu_custom_call.1} parent=5 // pred_fallthru
        _
      %p261 = scmp.lt.s32.totalorder %s28, 4
      // Predicated region
      $region17: #{tpu_custom_call.1} parent=5 // pred_check
        %p262 = pneg %p261
      $region18: #{tpu_custom_call.1} parent=5 // pred_check_branch
        %264 = sbr.rel (%p262) target = $region20
      $region19: #{tpu_custom_call.1} parent=5 // pred_region
        // Predicated region
        $region21: #{tpu_custom_call.1} parent=19 // pred_check
          %p265 = pneg %p60
        $region22: #{tpu_custom_call.1} parent=19 // pred_check_branch
          %267 = sbr.rel (%p265) target = $region24
        $region23: #{tpu_custom_call.1} parent=19 // pred_region
          %s268 = sand.u32 %s50, 1
          %s269 = scalar_lea.sflag [#allocation3], %s268
          %s270 = sand.u32 %s50, 1
          %s271 = smul.addr %s270, 8
          %s272 = scalar_lea.vmem [#allocation2], %s271
          %s274 = ssub.s32 128, 128
          %275 = vsyncadd %s269, %s274
          %s276 = smul.addr %s35, 128
          %s277 = scalar_lea.hbm %s0, %s276
          %s279 = sshll.u32 %s272, 4
          %s280 = int_to_ptr.vmem [resolvable:$true] %s279
          %282 = dma.hbm_to_vmem [thread:$0]  %s277, 128, %s280, %s269
        $region24: #{tpu_custom_call.1} parent=19 // pred_fallthru
          _
        // Predicated region
        $region25: #{tpu_custom_call.1} parent=19 // pred_check
          %p283 = pneg %p107
        $region26: #{tpu_custom_call.1} parent=19 // pred_check_branch
          %285 = sbr.rel (%p283) target = $region28
        $region27: #{tpu_custom_call.1} parent=19 // pred_region
          %s286 = sand.u32 %s28, 1
          %s287 = scalar_lea.sflag [#allocation6], %s286
          %s288 = sand.u32 %s97, 1
          %s289 = smul.addr %s288, 32
          %s290 = scalar_lea.vmem [#allocation5], %s289
          %s292 = ssub.s32 512, 512
          %293 = vsyncadd %s287, %s292
          %s294 = smul.addr %s36, 4
          %s295 = smul.addr %s294, 128
          %s296 = scalar_lea.hbm %s2, %s295
          %s298 = sshll.u32 %s290, 4
          %s299 = int_to_ptr.vmem [resolvable:$true] %s298
          %301 = dma.hbm_to_vmem [thread:$0]  %s296, 512, %s299, %s287
        $region28: #{tpu_custom_call.1} parent=19 // pred_fallthru
          _
        // Predicated region
        $region29: #{tpu_custom_call.1} parent=19 // pred_check
          %p302 = pneg %p133
        $region30: #{tpu_custom_call.1} parent=19 // pred_check_branch
          %304 = sbr.rel (%p302) target = $region32
        $region31: #{tpu_custom_call.1} parent=19 // pred_region
          %s305 = sand.u32 %s28, 1
          %s306 = scalar_lea.sflag [#allocation6], %s305
          %s307 = sand.u32 %s123, 1
          %s308 = smul.addr %s307, 192
          %s309 = scalar_lea.vmem [#allocation7], %s308
          %s311 = ssub.s32 3072, 3072
          %312 = vsyncadd %s306, %s311
          %s313 = smul.addr %s36, 48
          %s314 = smul.addr %s313, 64
          %s315 = scalar_lea.hbm %s3, %s314
          %s316 = sshll.u32 %s309, 4
          %s317 = int_to_ptr.vmem [resolvable:$true] %s316
          %322 = dma.hbm_to_vmem [thread:$0]  %s315, 3072, %s317, %s306, 192, 192, 12
        $region32: #{tpu_custom_call.1} parent=19 // pred_fallthru
          _
        // Predicated region
        $region33: #{tpu_custom_call.1} parent=19 // pred_check
          %p323 = pneg %p159
        $region34: #{tpu_custom_call.1} parent=19 // pred_check_branch
          %325 = sbr.rel (%p323) target = $region36
        $region35: #{tpu_custom_call.1} parent=19 // pred_region
          %s326 = sand.u32 %s28, 1
          %s327 = scalar_lea.sflag [#allocation9], %s326
          %s328 = sand.u32 %s149, 1
          %s329 = smul.addr %s328, 64
          %s330 = scalar_lea.vmem [#allocation8], %s329
          %s332 = ssub.s32 1024, 1024
          %333 = vsyncadd %s327, %s332
          %s334 = smul.addr %s36, 16
          %s335 = smul.addr %s334, 64
          %s336 = scalar_lea.hbm %s4, %s335
          %s337 = sshll.u32 %s330, 4
          %s338 = int_to_ptr.vmem [resolvable:$true] %s337
          %343 = dma.hbm_to_vmem [thread:$0]  %s336, 1024, %s338, %s327, 64, 64, 4
        $region36: #{tpu_custom_call.1} parent=19 // pred_fallthru
          _
        // Predicated region
        $region37: #{tpu_custom_call.1} parent=19 // pred_check
          %p344 = pneg %p185
        $region38: #{tpu_custom_call.1} parent=19 // pred_check_branch
          %346 = sbr.rel (%p344) target = $region40
        $region39: #{tpu_custom_call.1} parent=19 // pred_region
          %s347 = sand.u32 %s28, 1
          %s348 = scalar_lea.sflag [#allocation9], %s347
          %s349 = sand.u32 %s175, 1
          %s350 = smul.addr %s349, 256
          %s351 = scalar_lea.vmem [#allocation10], %s350
          %s353 = ssub.s32 4096, 4096
          %354 = vsyncadd %s348, %s353
          %s355 = smul.addr %s36, 64
          %s356 = smul.addr %s355, 64
          %s357 = scalar_lea.hbm %s5, %s356
          %s358 = sshll.u32 %s351, 4
          %s359 = int_to_ptr.vmem [resolvable:$true] %s358
          %364 = dma.hbm_to_vmem [thread:$0]  %s357, 4096, %s359, %s348, 256, 256, 16
        $region40: #{tpu_custom_call.1} parent=19 // pred_fallthru
          _
        // Predicated region
        $region41: #{tpu_custom_call.1} parent=19 // pred_check
          %p365 = pneg %p211
        $region42: #{tpu_custom_call.1} parent=19 // pred_check_branch
          %367 = sbr.rel (%p365) target = $region44
        $region43: #{tpu_custom_call.1} parent=19 // pred_region
          %s368 = sand.u32 %s201, 1
          %s369 = scalar_lea.sflag [#allocation12], %s368
          %s370 = sand.u32 %s201, 1
          %s371 = smul.addr %s370, 256
          %s372 = scalar_lea.vmem [#allocation11], %s371
          %s374 = ssub.s32 4096, 4096
          %375 = vsyncadd %s369, %s374
          %s376 = smul.addr %s36, 64
          %s377 = smul.addr %s376, 64
          %s378 = scalar_lea.hbm %s6, %s377
          %s379 = sshll.u32 %s372, 4
          %s380 = int_to_ptr.vmem [resolvable:$true] %s379
          %385 = dma.hbm_to_vmem [thread:$0]  %s378, 4096, %s380, %s369, 64, 64, 4
        $region44: #{tpu_custom_call.1} parent=19 // pred_fallthru
          _
      $region20: #{tpu_custom_call.1} parent=5 // pred_fallthru
        _
      %p386 = scmp.le.s32.totalorder 1, %s28
      %p387 = scmp.lt.s32.totalorder %s28, 5
      %p388 = pnand %p386, %p387
      %p389 = pneg %p388
      // Predicated region
      $region45: #{tpu_custom_call.1} parent=5 // pred_check
        _
      $region46: #{tpu_custom_call.1} parent=5 // pred_check_branch
        %391 = sbr.rel (%p388) target = $region48
      $region47: #{tpu_custom_call.1} parent=5 // pred_region
        %s392 = ssub.s32 %s28, 1
        %s393 = sand.u32 %s53, 1
        %s394 = scalar_lea.sflag [#allocation3], %s393
        %s395 = sand.u32 %s53, 1
        %s396 = smul.addr %s395, 8
        %s397 = scalar_lea.vmem [#allocation2], %s396
        // Predicated region
        $region49: #{tpu_custom_call.1} parent=47 // pred_check
          %p398 = pneg %p66
        $region50: #{tpu_custom_call.1} parent=47 // pred_check_branch
          %400 = sbr.rel (%p398) target = $region52
        $region51: #{tpu_custom_call.1} parent=47 // pred_region
          %401 = dma.done %s394, 128
        $region52: #{tpu_custom_call.1} parent=47 // pred_fallthru
          _
        %s402 = sand.u32 %s33, 1
        %s403 = scalar_lea.sflag [#allocation6], %s402
        %s404 = sand.u32 %s100, 1
        %s405 = smul.addr %s404, 32
        %s406 = scalar_lea.vmem [#allocation5], %s405
        // Predicated region
        $region53: #{tpu_custom_call.1} parent=47 // pred_check
          %p407 = pneg %p113
        $region54: #{tpu_custom_call.1} parent=47 // pred_check_branch
          %409 = sbr.rel (%p407) target = $region56
        $region55: #{tpu_custom_call.1} parent=47 // pred_region
          %410 = dma.done %s403, 512
        $region56: #{tpu_custom_call.1} parent=47 // pred_fallthru
          _
        %s411 = sand.u32 %s33, 1
        %s412 = scalar_lea.sflag [#allocation6], %s411
        %s413 = sand.u32 %s126, 1
        %s414 = smul.addr %s413, 192
        %s415 = scalar_lea.vmem [#allocation7], %s414
        // Predicated region
        $region57: #{tpu_custom_call.1} parent=47 // pred_check
          %p416 = pneg %p139
        $region58: #{tpu_custom_call.1} parent=47 // pred_check_branch
          %418 = sbr.rel (%p416) target = $region60
        $region59: #{tpu_custom_call.1} parent=47 // pred_region
          %419 = dma.done %s412, 3072
        $region60: #{tpu_custom_call.1} parent=47 // pred_fallthru
          _
        %s420 = sand.u32 %s33, 1
        %s421 = scalar_lea.sflag [#allocation9], %s420
        %s422 = sand.u32 %s152, 1
        %s423 = smul.addr %s422, 64
        %s424 = scalar_lea.vmem [#allocation8], %s423
        // Predicated region
        $region61: #{tpu_custom_call.1} parent=47 // pred_check
          %p425 = pneg %p165
        $region62: #{tpu_custom_call.1} parent=47 // pred_check_branch
          %427 = sbr.rel (%p425) target = $region64
        $region63: #{tpu_custom_call.1} parent=47 // pred_region
          %428 = dma.done %s421, 1024
        $region64: #{tpu_custom_call.1} parent=47 // pred_fallthru
          _
        %s429 = sand.u32 %s33, 1
        %s430 = scalar_lea.sflag [#allocation9], %s429
        %s431 = sand.u32 %s178, 1
        %s432 = smul.addr %s431, 256
        %s433 = scalar_lea.vmem [#allocation10], %s432
        // Predicated region
        $region65: #{tpu_custom_call.1} parent=47 // pred_check
          %p434 = pneg %p191
        $region66: #{tpu_custom_call.1} parent=47 // pred_check_branch
          %436 = sbr.rel (%p434) target = $region68
        $region67: #{tpu_custom_call.1} parent=47 // pred_region
          %437 = dma.done %s430, 4096
        $region68: #{tpu_custom_call.1} parent=47 // pred_fallthru
          _
        %s438 = sand.u32 %s204, 1
        %s439 = scalar_lea.sflag [#allocation12], %s438
        %s440 = sand.u32 %s204, 1
        %s441 = smul.addr %s440, 256
        %s442 = scalar_lea.vmem [#allocation11], %s441
        // Predicated region
        $region69: #{tpu_custom_call.1} parent=47 // pred_check
          %p443 = pneg %p217
        $region70: #{tpu_custom_call.1} parent=47 // pred_check_branch
          %445 = sbr.rel (%p443) target = $region72
        $region71: #{tpu_custom_call.1} parent=47 // pred_region
          %446 = dma.done %s439, 4096
        $region72: #{tpu_custom_call.1} parent=47 // pred_fallthru
          _
        %s447 = sand.u32 %s53, 1
        %s448 = scalar_lea.sflag [#allocation3], %s447
        %s449 = sand.u32 %s53, 1
        %s450 = smul.addr %s449, 8
        %s451 = scalar_lea.vmem [#allocation2], %s450
        %p452 = pneg %p66
        %p453 = pneg %p63
        %p454 = pneg %p87
        %p455 = pneg %p84
        %s456 = sand.u32 %s33, 1
        %s457 = scalar_lea.sflag [#allocation6], %s456
        %s458 = sand.u32 %s100, 1
        %s459 = smul.addr %s458, 32
        %s460 = scalar_lea.vmem [#allocation5], %s459
        %p461 = pneg %p113
        %p462 = pneg %p110
        %s463 = sand.u32 %s33, 1
        %s464 = scalar_lea.sflag [#allocation6], %s463
        %s465 = sand.u32 %s126, 1
        %s466 = smul.addr %s465, 192
        %s467 = scalar_lea.vmem [#allocation7], %s466
        %p468 = pneg %p139
        %p469 = pneg %p136
        %s470 = sand.u32 %s33, 1
        %s471 = scalar_lea.sflag [#allocation9], %s470
        %s472 = sand.u32 %s152, 1
        %s473 = smul.addr %s472, 64
        %s474 = scalar_lea.vmem [#allocation8], %s473
        %p475 = pneg %p165
        %p476 = pneg %p162
        %s477 = sand.u32 %s33, 1
        %s478 = scalar_lea.sflag [#allocation9], %s477
        %s479 = sand.u32 %s178, 1
        %s480 = smul.addr %s479, 256
        %s481 = scalar_lea.vmem [#allocation10], %s480
        %p482 = pneg %p191
        %p483 = pneg %p188
        %s484 = sand.u32 %s204, 1
        %s485 = scalar_lea.sflag [#allocation12], %s484
        %s486 = sand.u32 %s204, 1
        %s487 = smul.addr %s486, 256
        %s488 = scalar_lea.vmem [#allocation11], %s487
        %p489 = pneg %p217
        %p490 = pneg %p214
        %p491 = pneg %p243
        %p492 = pneg %p240
        %s493 = sand.u32 %s230, 1
        %s494 = scalar_lea.sflag [#allocation4], %s493
        %s495 = sand.u32 %s230, 1
        %s496 = smul.addr %s495, 8
        %s497 = scalar_lea.vmem [#allocation13], %s496
        %p499 = scmp.eq.s32.totalorder %s38, 0
        // Predicated region
        $region73: #{tpu_custom_call.1} parent=47 // pred_check
          %p500 = pneg %p499
        $region74: #{tpu_custom_call.1} parent=47 // pred_check_branch
          %502 = sbr.rel (%p500) target = $region76
        $region75: #{tpu_custom_call.1} parent=47 // pred_region
          %v503 = vld [vmem:[%s397] sm:$0xff]
          %504 = vst [vmem:[%s497] sm:$0xff] %v503
        $region76: #{tpu_custom_call.1} parent=47 // pred_fallthru
          _
        %v505 = vld [vmem:[%s497] sm:$0xff]
        %v506 = vld [vmem:[%s1] sm:$0xff]
        %v507 = vld [vmem:[%s406] sm:$0xff]
        %v508 = vld [vmem:[%s406 + $0x8] sm:$0xff]
        %v509 = vld [vmem:[%s406 + $0x10] sm:$0xff]
        %v510 = vld [vmem:[%s406 + $0x18] sm:$0xff]
        %511 = vadd.xlane.f32.xlu0 %v505
        %v512 = vpop.xlane.xlu0 %511
        %v513 = vrcp.pop 128.0
        %v514 = vmul.f32 %v512, %v513
        %v515 = vsub.f32 %v505, %v514
        %v516 = vmul.f32 %v515, %v515
        %517 = vadd.xlane.f32.xlu0 %v516
        %v518 = vpop.xlane.xlu0 %517
        %v519 = vmul.f32 %v518, %v513
        %v520 = vadd.f32 %v519, 1e-05
        %v521 = vrsqrt.pop %v520
        %v522 = vmul.f32 %v515, %v521
        %v523 = vlaneseq
        %v524 = vshrl.u32 %v523, 7
        %v525 = vsub.s32 0, %v524
        %v526 = vrot.slane %v507, %v525
        %v527 = vmul.f32 %v522, %v526
        %v528 = vlaneseq
        %v529 = vshrl.u32 %v528, 7
        %v530 = vsub.s32 1, %v529
        %v531 = vrot.slane %v507, %v530
        %v532 = vadd.f32 %v527, %v531
        %v533 = vpack.c.bf16 %v532, %v532
        %v534 = vld [vmem:[%s415] sm:$0xff]
        %v535 = vld [vmem:[%s415 + $0x8] sm:$0xf]
        %v536 = vld [vmem:[%s415 + $0xc] sm:$0xff]
        %v537 = vld [vmem:[%s415 + $0x14] sm:$0xf]
        %v538 = vld [vmem:[%s415 + $0x18] sm:$0xff]
        %v539 = vld [vmem:[%s415 + $0x20] sm:$0xf]
        %v540 = vld [vmem:[%s415 + $0x24] sm:$0xff]
        %v541 = vld [vmem:[%s415 + $0x2c] sm:$0xf]
        %v542 = vld [vmem:[%s415 + $0x30] sm:$0xff]
        %v543 = vld [vmem:[%s415 + $0x38] sm:$0xf]
        %v544 = vld [vmem:[%s415 + $0x3c] sm:$0xff]
        %v545 = vld [vmem:[%s415 + $0x44] sm:$0xf]
        %v546 = vld [vmem:[%s415 + $0x48] sm:$0xff]
        %v547 = vld [vmem:[%s415 + $0x50] sm:$0xf]
        %v548 = vld [vmem:[%s415 + $0x54] sm:$0xff]
        %v549 = vld [vmem:[%s415 + $0x5c] sm:$0xf]
        %v550 = vld [vmem:[%s415 + $0x60] sm:$0xff]
        %v551 = vld [vmem:[%s415 + $0x68] sm:$0xf]
        %v552 = vld [vmem:[%s415 + $0x6c] sm:$0xff]
        %v553 = vld [vmem:[%s415 + $0x74] sm:$0xf]
        %v554 = vld [vmem:[%s415 + $0x78] sm:$0xff]
        %v555 = vld [vmem:[%s415 + $0x80] sm:$0xf]
        %v556 = vld [vmem:[%s415 + $0x84] sm:$0xff]
        %v557 = vld [vmem:[%s415 + $0x8c] sm:$0xf]
        %v558 = vld [vmem:[%s415 + $0x90] sm:$0xff]
        %v559 = vld [vmem:[%s415 + $0x98] sm:$0xf]
        %v560 = vld [vmem:[%s415 + $0x9c] sm:$0xff]
        %v561 = vld [vmem:[%s415 + $0xa4] sm:$0xf]
        %v562 = vld [vmem:[%s415 + $0xa8] sm:$0xff]
        %v563 = vld [vmem:[%s415 + $0xb0] sm:$0xf]
        %v564 = vld [vmem:[%s415 + $0xb4] sm:$0xff]
        %v565 = vld [vmem:[%s415 + $0xbc] sm:$0xf]
        %v566 = vlaneseq
        %v567 = vshrl.u32 %v566, 7
        %v568 = vsub.s32 4, %v567
        %v569 = vrot.slane %v507, %v568
        %v570 = vlaneseq
        %v571 = vshrl.u32 %v570, 7
        %v572 = vsub.s32 4, %v571
        %v573 = vrot.slane %v508, %v572
        %v574 = vlaneseq
        %v575 = vshrl.u32 %v574, 7
        %v576 = vsub.s32 4, %v575
        %v577 = vrot.slane %v509, %v576
        %v610 = vunpack.c.l.b16 %v534
        %v611 = vunpack.c.h.b16 %v534
        %v612 = vunpack.c.l.b16 %v535
        %v613 = vunpack.c.l.b16 %v536
        %v614 = vunpack.c.h.b16 %v536
        %v615 = vunpack.c.l.b16 %v537
        %v616 = vunpack.c.l.b16 %v538
        %v617 = vunpack.c.h.b16 %v538
        %v618 = vunpack.c.l.b16 %v539
        %v619 = vunpack.c.l.b16 %v540
        %v620 = vunpack.c.h.b16 %v540
        %v621 = vunpack.c.l.b16 %v541
        %v622 = vunpack.c.l.b16 %v542
        %v623 = vunpack.c.h.b16 %v542
        %v624 = vunpack.c.l.b16 %v543
        %v625 = vunpack.c.l.b16 %v544
        %v626 = vunpack.c.h.b16 %v544
        %v627 = vunpack.c.l.b16 %v545
        %v628 = vunpack.c.l.b16 %v546
        %v629 = vunpack.c.h.b16 %v546
        %v630 = vunpack.c.l.b16 %v547
        %v631 = vunpack.c.l.b16 %v548
        %v632 = vunpack.c.h.b16 %v548
        %v633 = vunpack.c.l.b16 %v549
        %v634 = vunpack.c.l.b16 %v550
        %v635 = vunpack.c.h.b16 %v550
        %v636 = vunpack.c.l.b16 %v551
        %v637 = vunpack.c.l.b16 %v552
        %v638 = vunpack.c.h.b16 %v552
        %v639 = vunpack.c.l.b16 %v553
        %v640 = vunpack.c.l.b16 %v554
        %v641 = vunpack.c.h.b16 %v554
        %v642 = vunpack.c.l.b16 %v555
        %v643 = vunpack.c.l.b16 %v556
        %v644 = vunpack.c.h.b16 %v556
        %v645 = vunpack.c.l.b16 %v557
        %v646 = vunpack.c.l.b16 %v558
        %v647 = vunpack.c.h.b16 %v558
        %v648 = vunpack.c.l.b16 %v559
        %v649 = vunpack.c.l.b16 %v560
        %v650 = vunpack.c.h.b16 %v560
        %v651 = vunpack.c.l.b16 %v561
        %v652 = vunpack.c.l.b16 %v562
        %v653 = vunpack.c.h.b16 %v562
        %v654 = vunpack.c.l.b16 %v563
        %v655 = vunpack.c.l.b16 %v564
        %v656 = vunpack.c.h.b16 %v564
        %v657 = vunpack.c.l.b16 %v565
        %v658 = vpack.c.b16 %v613, %v610
        %v659 = vpack.c.b16 %v614, %v611
        %v660 = vpack.c.b16 %v615, %v612
        %v661 = vpack.c.b16 %v619, %v616
        %v662 = vpack.c.b16 %v620, %v617
        %v663 = vpack.c.b16 %v621, %v618
        %v664 = vpack.c.b16 %v625, %v622
        %v665 = vpack.c.b16 %v626, %v623
        %v666 = vpack.c.b16 %v627, %v624
        %v667 = vpack.c.b16 %v631, %v628
        %v668 = vpack.c.b16 %v632, %v629
        %v669 = vpack.c.b16 %v633, %v630
        %v670 = vpack.c.b16 %v637, %v634
        %v671 = vpack.c.b16 %v638, %v635
        %v672 = vpack.c.b16 %v639, %v636
        %v673 = vpack.c.b16 %v643, %v640
        %v674 = vpack.c.b16 %v644, %v641
        %v675 = vpack.c.b16 %v645, %v642
        %v676 = vpack.c.b16 %v649, %v646
        %v677 = vpack.c.b16 %v650, %v647
        %v678 = vpack.c.b16 %v651, %v648
        %v679 = vpack.c.b16 %v655, %v652
        %v680 = vpack.c.b16 %v656, %v653
        %v681 = vpack.c.b16 %v657, %v654
        %706 = vmatprep.subr.bf16.mxu0 %v659
        %707 = vmatpush1.bf16.msra.mxu0 %v658
        %708 = vmatprep.subr.bf16.mxu0 %v662
        %709 = vmatpush1.bf16.msra.mxu0 %v661
        %710 = vmatprep.subr.bf16.mxu0 %v665
        %711 = vmatpush1.bf16.msra.mxu0 %v664
        %712 = vmatprep.subr.bf16.mxu0 %v668
        %713 = vmatpush1.bf16.msra.mxu0 %v667
        %714 = vmatprep.subr.bf16.mxu0 %v671
        %715 = vmatpush1.bf16.msra.mxu0 %v670
        %716 = vmatprep.subr.bf16.mxu0 %v674
        %717 = vmatpush1.bf16.msra.mxu0 %v673
        %718 = vmatprep.subr.bf16.mxu0 %v677
        %719 = vmatpush1.bf16.msra.mxu0 %v676
        %720 = vmatprep.subr.bf16.mxu0 %v680
        %721 = vmatpush1.bf16.msra.mxu0 %v679
        %722 = vmatprep.subr.bf16.mxu0 0
        %723 = vmatpush1.bf16.msra.mxu0 0
        %724 = vmatprep.subr.bf16.mxu0 0
        %725 = vmatpush1.bf16.msra.mxu0 0
        %726 = vmatprep.subr.bf16.mxu0 0
        %727 = vmatpush1.bf16.msra.mxu0 0
        %728 = vmatprep.subr.bf16.mxu0 0
        %729 = vmatpush1.bf16.msra.mxu0 0
        %730 = vmatprep.subr.bf16.mxu0 0
        %731 = vmatpush1.bf16.msra.mxu0 0
        %732 = vmatprep.subr.bf16.mxu0 0
        %733 = vmatpush1.bf16.msra.mxu0 0
        %734 = vmatprep.subr.bf16.mxu0 0
        %735 = vmatpush1.bf16.msra.mxu0 0
        %736 = vmatprep.subr.bf16.mxu0 0
        %737 = vmatpush1.bf16.msra.mxu0 0
        %738 = vmatprep.mubr.bf16.mxu0 0
        %739 = vmatmul.mubr.bf16.gmra.mrb[0].mxu0 %v533
        %v740 = vpop.f32.mrb[0].mxu0
        %v741 = vadd.f32 %v569, %v740
        %v742 = vpop.f32.mrb[0].mxu0
        %v743 = vadd.f32 %v573, %v742
        %v744 = vpop.f32.mrb[0].mxu0
        %v745 = vpop.f32.mrb[0].mxu0
        %746 = vdwg.mxu0
        %747 = vmatprep.subr.bf16.mxu0 0
        %748 = vmatpush1.bf16.msra.mxu0 %v660
        %749 = vmatprep.subr.bf16.mxu0 0
        %750 = vmatpush1.bf16.msra.mxu0 %v663
        %751 = vmatprep.subr.bf16.mxu0 0
        %752 = vmatpush1.bf16.msra.mxu0 %v666
        %753 = vmatprep.subr.bf16.mxu0 0
        %754 = vmatpush1.bf16.msra.mxu0 %v669
        %755 = vmatprep.subr.bf16.mxu0 0
        %756 = vmatpush1.bf16.msra.mxu0 %v672
        %757 = vmatprep.subr.bf16.mxu0 0
        %758 = vmatpush1.bf16.msra.mxu0 %v675
        %759 = vmatprep.subr.bf16.mxu0 0
        %760 = vmatpush1.bf16.msra.mxu0 %v678
        %761 = vmatprep.subr.bf16.mxu0 0
        %762 = vmatpush1.bf16.msra.mxu0 %v681
        %763 = vmatprep.subr.bf16.mxu0 0
        %764 = vmatpush1.bf16.msra.mxu0 0
        %765 = vmatprep.subr.bf16.mxu0 0
        %766 = vmatpush1.bf16.msra.mxu0 0
        %767 = vmatprep.subr.bf16.mxu0 0
        %768 = vmatpush1.bf16.msra.mxu0 0
        %769 = vmatprep.subr.bf16.mxu0 0
        %770 = vmatpush1.bf16.msra.mxu0 0
        %771 = vmatprep.subr.bf16.mxu0 0
        %772 = vmatpush1.bf16.msra.mxu0 0
        %773 = vmatprep.subr.bf16.mxu0 0
        %774 = vmatpush1.bf16.msra.mxu0 0
        %775 = vmatprep.subr.bf16.mxu0 0
        %776 = vmatpush1.bf16.msra.mxu0 0
        %777 = vmatprep.subr.bf16.mxu0 0
        %778 = vmatpush1.bf16.msra.mxu0 0
        %779 = vmatprep.mubr.bf16.mxu0 0
        %780 = vmatmul.mubr.bf16.gmra.mrb[0].mxu0 %v533
        %v781 = vpop.f32.mrb[0].mxu0
        %v782 = vadd.f32 %v577, %v781
        %v783 = vpop.f32.mrb[0].mxu0
        %v784 = vpop.f32.mrb[0].mxu0
        %v785 = vpop.f32.mrb[0].mxu0
        %786 = vdwg.mxu0
        %788 = vrot.lane.b32.xlu0 %v741, 96
        %v789 = vpop.permute.xlu0 %788
        %791 = vrot.lane.b32.xlu0 %v741, 64
        %v792 = vpop.permute.xlu0 %791
        %794 = vrot.lane.b32.xlu0 %v741, 32
        %v795 = vpop.permute.xlu0 %794
        %v797 = vpack.c.bf16 %v741, %v741
        %v798 = vpack.c.bf16 %v789, %v789
        %v799 = vpack.c.bf16 %v792, %v792
        %v800 = vpack.c.bf16 %v795, %v795
        %802 = vrot.lane.b32.xlu0 %v743, 96
        %v803 = vpop.permute.xlu0 %802
        %805 = vrot.lane.b32.xlu0 %v743, 64
        %v806 = vpop.permute.xlu0 %805
        %808 = vrot.lane.b32.xlu0 %v743, 32
        %v809 = vpop.permute.xlu0 %808
        %v811 = vpack.c.bf16 %v743, %v743
        %v812 = vpack.c.bf16 %v803, %v803
        %v813 = vpack.c.bf16 %v806, %v806
        %v814 = vpack.c.bf16 %v809, %v809
        %816 = vrot.lane.b32.xlu0 %v782, 96
        %v817 = vpop.permute.xlu0 %816
        %819 = vrot.lane.b32.xlu0 %v782, 64
        %v820 = vpop.permute.xlu0 %819
        %822 = vrot.lane.b32.xlu0 %v782, 32
        %v823 = vpop.permute.xlu0 %822
        %v825 = vpack.c.bf16 %v782, %v782
        %v826 = vpack.c.bf16 %v817, %v817
        %v827 = vpack.c.bf16 %v820, %v820
        %v828 = vpack.c.bf16 %v823, %v823
        %vm829 = vcmask 261120
        %v831 = vsel %vm829, %v797, 0
        %v834 = vsel %vm829, %v811, 0
        %836 = vmatprep.subr.bf16.mxu0 0
        %837 = vmatpush1.bf16.xpose.msra.mxu0 %v834
        %838 = vmatprep.subr.bf16.mxu0 0
        %839 = vmatpush1.bf16.xpose.msra.mxu0 0
        %840 = vmatprep.subr.bf16.mxu0 0
        %841 = vmatpush1.bf16.xpose.msra.mxu0 0
        %842 = vmatprep.subr.bf16.mxu0 0
        %843 = vmatpush1.bf16.xpose.msra.mxu0 0
        %844 = vmatprep.subr.bf16.mxu0 0
        %845 = vmatpush1.bf16.xpose.msra.mxu0 0
        %846 = vmatprep.subr.bf16.mxu0 0
        %847 = vmatpush1.bf16.xpose.msra.mxu0 0
        %848 = vmatprep.subr.bf16.mxu0 0
        %849 = vmatpush1.bf16.xpose.msra.mxu0 0
        %850 = vmatprep.subr.bf16.mxu0 0
        %851 = vmatpush1.bf16.xpose.msra.mxu0 0
        %852 = vmatprep.subr.bf16.mxu0 0
        %853 = vmatpush1.bf16.xpose.msra.mxu0 0
        %854 = vmatprep.subr.bf16.mxu0 0
        %855 = vmatpush1.bf16.xpose.msra.mxu0 0
        %856 = vmatprep.subr.bf16.mxu0 0
        %857 = vmatpush1.bf16.xpose.msra.mxu0 0
        %858 = vmatprep.subr.bf16.mxu0 0
        %859 = vmatpush1.bf16.xpose.msra.mxu0 0
        %860 = vmatprep.subr.bf16.mxu0 0
        %861 = vmatpush1.bf16.xpose.msra.mxu0 0
        %862 = vmatprep.subr.bf16.mxu0 0
        %863 = vmatpush1.bf16.xpose.msra.mxu0 0
        %864 = vmatprep.subr.bf16.mxu0 0
        %865 = vmatpush1.bf16.xpose.msra.mxu0 0
        %866 = vmatprep.subr.bf16.mxu0 0
        %867 = vmatpush1.bf16.xpose.msra.mxu0 0
        %868 = vmatprep.mubr.bf16.mxu0 0
        %869 = vmatmul.mubr.bf16.gmra.mrb[0].mxu0 %v831
        %v870 = vpop.f32.mrb[0].mxu0
        %v871 = vadd.f32 0.0, %v870
        %v872 = vpop.f32.mrb[0].mxu0
        %v873 = vpop.f32.mrb[0].mxu0
        %v874 = vpop.f32.mrb[0].mxu0
        %875 = vdwg.mxu0
        %v877 = vsel %vm829, %v798, 0
        %v880 = vsel %vm829, %v812, 0
        %882 = vmatprep.subr.bf16.mxu0 0
        %883 = vmatpush1.bf16.xpose.msra.mxu0 %v880
        %884 = vmatprep.subr.bf16.mxu0 0
        %885 = vmatpush1.bf16.xpose.msra.mxu0 0
        %886 = vmatprep.subr.bf16.mxu0 0
        %887 = vmatpush1.bf16.xpose.msra.mxu0 0
        %888 = vmatprep.subr.bf16.mxu0 0
        %889 = vmatpush1.bf16.xpose.msra.mxu0 0
        %890 = vmatprep.subr.bf16.mxu0 0
        %891 = vmatpush1.bf16.xpose.msra.mxu0 0
        %892 = vmatprep.subr.bf16.mxu0 0
        %893 = vmatpush1.bf16.xpose.msra.mxu0 0
        %894 = vmatprep.subr.bf16.mxu0 0
        %895 = vmatpush1.bf16.xpose.msra.mxu0 0
        %896 = vmatprep.subr.bf16.mxu0 0
        %897 = vmatpush1.bf16.xpose.msra.mxu0 0
        %898 = vmatprep.subr.bf16.mxu0 0
        %899 = vmatpush1.bf16.xpose.msra.mxu0 0
        %900 = vmatprep.subr.bf16.mxu0 0
        %901 = vmatpush1.bf16.xpose.msra.mxu0 0
        %902 = vmatprep.subr.bf16.mxu0 0
        %903 = vmatpush1.bf16.xpose.msra.mxu0 0
        %904 = vmatprep.subr.bf16.mxu0 0
        %905 = vmatpush1.bf16.xpose.msra.mxu0 0
        %906 = vmatprep.subr.bf16.mxu0 0
        %907 = vmatpush1.bf16.xpose.msra.mxu0 0
        %908 = vmatprep.subr.bf16.mxu0 0
        %909 = vmatpush1.bf16.xpose.msra.mxu0 0
        %910 = vmatprep.subr.bf16.mxu0 0
        %911 = vmatpush1.bf16.xpose.msra.mxu0 0
        %912 = vmatprep.subr.bf16.mxu0 0
        %913 = vmatpush1.bf16.xpose.msra.mxu0 0
        %914 = vmatprep.mubr.bf16.mxu0 0
        %915 = vmatmul.mubr.bf16.gmra.mrb[0].mxu0 %v877
        %v916 = vpop.f32.mrb[0].mxu0
        %v917 = vadd.f32 0.0, %v916
        %v918 = vpop.f32.mrb[0].mxu0
        %v919 = vpop.f32.mrb[0].mxu0
        %v920 = vpop.f32.mrb[0].mxu0
        %921 = vdwg.mxu0
        %v923 = vsel %vm829, %v799, 0
        %v926 = vsel %vm829, %v813, 0
        %928 = vmatprep.subr.bf16.mxu0 0
        %929 = vmatpush1.bf16.xpose.msra.mxu0 %v926
        %930 = vmatprep.subr.bf16.mxu0 0
        %931 = vmatpush1.bf16.xpose.msra.mxu0 0
        %932 = vmatprep.subr.bf16.mxu0 0
        %933 = vmatpush1.bf16.xpose.msra.mxu0 0
        %934 = vmatprep.subr.bf16.mxu0 0
        %935 = vmatpush1.bf16.xpose.msra.mxu0 0
        %936 = vmatprep.subr.bf16.mxu0 0
        %937 = vmatpush1.bf16.xpose.msra.mxu0 0
        %938 = vmatprep.subr.bf16.mxu0 0
        %939 = vmatpush1.bf16.xpose.msra.mxu0 0
        %940 = vmatprep.subr.bf16.mxu0 0
        %941 = vmatpush1.bf16.xpose.msra.mxu0 0
        %942 = vmatprep.subr.bf16.mxu0 0
        %943 = vmatpush1.bf16.xpose.msra.mxu0 0
        %944 = vmatprep.subr.bf16.mxu0 0
        %945 = vmatpush1.bf16.xpose.msra.mxu0 0
        %946 = vmatprep.subr.bf16.mxu0 0
        %947 = vmatpush1.bf16.xpose.msra.mxu0 0
        %948 = vmatprep.subr.bf16.mxu0 0
        %949 = vmatpush1.bf16.xpose.msra.mxu0 0
        %950 = vmatprep.subr.bf16.mxu0 0
        %951 = vmatpush1.bf16.xpose.msra.mxu0 0
        %952 = vmatprep.subr.bf16.mxu0 0
        %953 = vmatpush1.bf16.xpose.msra.mxu0 0
        %954 = vmatprep.subr.bf16.mxu0 0
        %955 = vmatpush1.bf16.xpose.msra.mxu0 0
        %956 = vmatprep.subr.bf16.mxu0 0
        %957 = vmatpush1.bf16.xpose.msra.mxu0 0
        %958 = vmatprep.subr.bf16.mxu0 0
        %959 = vmatpush1.bf16.xpose.msra.mxu0 0
        %960 = vmatprep.mubr.bf16.mxu0 0
        %961 = vmatmul.mubr.bf16.gmra.mrb[0].mxu0 %v923
        %v962 = vpop.f32.mrb[0].mxu0
        %v963 = vadd.f32 0.0, %v962
        %v964 = vpop.f32.mrb[0].mxu0
        %v965 = vpop.f32.mrb[0].mxu0
        %v966 = vpop.f32.mrb[0].mxu0
        %967 = vdwg.mxu0
        %v969 = vsel %vm829, %v800, 0
        %v972 = vsel %vm829, %v814, 0
        %974 = vmatprep.subr.bf16.mxu0 0
        %975 = vmatpush1.bf16.xpose.msra.mxu0 %v972
        %976 = vmatprep.subr.bf16.mxu0 0
        %977 = vmatpush1.bf16.xpose.msra.mxu0 0
        %978 = vmatprep.subr.bf16.mxu0 0
        %979 = vmatpush1.bf16.xpose.msra.mxu0 0
        %980 = vmatprep.subr.bf16.mxu0 0
        %981 = vmatpush1.bf16.xpose.msra.mxu0 0
        %982 = vmatprep.subr.bf16.mxu0 0
        %983 = vmatpush1.bf16.xpose.msra.mxu0 0
        %984 = vmatprep.subr.bf16.mxu0 0
        %985 = vmatpush1.bf16.xpose.msra.mxu0 0
        %986 = vmatprep.subr.bf16.mxu0 0
        %987 = vmatpush1.bf16.xpose.msra.mxu0 0
        %988 = vmatprep.subr.bf16.mxu0 0
        %989 = vmatpush1.bf16.xpose.msra.mxu0 0
        %990 = vmatprep.subr.bf16.mxu0 0
        %991 = vmatpush1.bf16.xpose.msra.mxu0 0
        %992 = vmatprep.subr.bf16.mxu0 0
        %993 = vmatpush1.bf16.xpose.msra.mxu0 0
        %994 = vmatprep.subr.bf16.mxu0 0
        %995 = vmatpush1.bf16.xpose.msra.mxu0 0
        %996 = vmatprep.subr.bf16.mxu0 0
        %997 = vmatpush1.bf16.xpose.msra.mxu0 0
        %998 = vmatprep.subr.bf16.mxu0 0
        %999 = vmatpush1.bf16.xpose.msra.mxu0 0
        %1000 = vmatprep.subr.bf16.mxu0 0
        %1001 = vmatpush1.bf16.xpose.msra.mxu0 0
        %1002 = vmatprep.subr.bf16.mxu0 0
        %1003 = vmatpush1.bf16.xpose.msra.mxu0 0
        %1004 = vmatprep.subr.bf16.mxu0 0
        %1005 = vmatpush1.bf16.xpose.msra.mxu0 0
        %1006 = vmatprep.mubr.bf16.mxu0 0
        %1007 = vmatmul.mubr.bf16.gmra.mrb[0].mxu0 %v969
        %v1008 = vpop.f32.mrb[0].mxu0
        %v1009 = vadd.f32 0.0, %v1008
        %v1010 = vpop.f32.mrb[0].mxu0
        %v1011 = vpop.f32.mrb[0].mxu0
        %v1012 = vpop.f32.mrb[0].mxu0
        %1013 = vdwg.mxu0
        %v1014 = vmul.f32 %v871, 0.17677669
        %v1015 = vmul.f32 %v917, 0.17677669
        %v1016 = vmul.f32 %v963, 0.17677669
        %v1017 = vmul.f32 %v1009, 0.17677669
        %v1018 = vadd.f32 %v1014, %v506
        %v1019 = vadd.f32 %v1015, %v506
        %v1020 = vadd.f32 %v1016, %v506
        %v1021 = vadd.f32 %v1017, %v506
        %vm1022 = vcmask 64512
        %v1023 = vsel %vm1022, %v1018, -inf
        %1024 = vmax.xlane.f32.xlu0 %v1023
        %v1025 = vpop.xlane.xlu0 %1024
        %v1026 = vsel %vm1022, %v1019, -inf
        %1027 = vmax.xlane.f32.xlu0 %v1026
        %v1028 = vpop.xlane.xlu0 %1027
        %v1029 = vsel %vm1022, %v1020, -inf
        %1030 = vmax.xlane.f32.xlu0 %v1029
        %v1031 = vpop.xlane.xlu0 %1030
        %v1032 = vsel %vm1022, %v1021, -inf
        %1033 = vmax.xlane.f32.xlu0 %v1032
        %v1034 = vpop.xlane.xlu0 %1033
        %v1035 = vsub.f32 %v1018, %v1025
        %v1036 = vsub.f32 %v1019, %v1028
        %v1037 = vsub.f32 %v1020, %v1031
        %v1038 = vsub.f32 %v1021, %v1034
        %v1039 = vmul.f32 %v1035, 1.442695
        %v1040 = vpow.pop %v1039
        %v1041 = vmul.f32 %v1036, 1.442695
        %v1042 = vpow.pop %v1041
        %v1043 = vmul.f32 %v1037, 1.442695
        %v1044 = vpow.pop %v1043
        %v1045 = vmul.f32 %v1038, 1.442695
        %v1046 = vpow.pop %v1045
        %v1047 = vsel %vm1022, %v1040, 0.0
        %1048 = vadd.xlane.f32.xlu0 %v1047
        %v1049 = vpop.xlane.xlu0 %1048
        %v1050 = vsel %vm1022, %v1042, 0.0
        %1051 = vadd.xlane.f32.xlu0 %v1050
        %v1052 = vpop.xlane.xlu0 %1051
        %v1053 = vsel %vm1022, %v1044, 0.0
        %1054 = vadd.xlane.f32.xlu0 %v1053
        %v1055 = vpop.xlane.xlu0 %1054
        %v1056 = vsel %vm1022, %v1046, 0.0
        %1057 = vadd.xlane.f32.xlu0 %v1056
        %v1058 = vpop.xlane.xlu0 %1057
        %v1059 = vrcp.pop %v1049
        %v1060 = vrcp.pop %v1052
        %v1061 = vrcp.pop %v1055
        %v1062 = vrcp.pop %v1058
        %v1063 = vmul.f32 %v1040, %v1059
        %v1064 = vmul.f32 %v1042, %v1060
        %v1065 = vmul.f32 %v1044, %v1061
        %v1066 = vmul.f32 %v1046, %v1062
        %v1067 = vpack.c.bf16 %v1063, %v1063
        %v1068 = vpack.c.bf16 %v1064, %v1064
        %v1069 = vpack.c.bf16 %v1065, %v1065
        %v1070 = vpack.c.bf16 %v1066, %v1066
        %v1072 = vsel %vm1022, %v1067, 0
        %vm1074 = vcmask 1043456
        %v1076 = vsel %vm1074, %v825, 0
        %1078 = vmatprep.subr.bf16.mxu0 0
        %1079 = vmatpush1.bf16.msra.mxu0 %v1076
        %1080 = vmatprep.subr.bf16.mxu0 0
        %1081 = vmatpush1.bf16.msra.mxu0 0
        %1082 = vmatprep.subr.bf16.mxu0 0
        %1083 = vmatpush1.bf16.msra.mxu0 0
        %1084 = vmatprep.subr.bf16.mxu0 0
        %1085 = vmatpush1.bf16.msra.mxu0 0
        %1086 = vmatprep.subr.bf16.mxu0 0
        %1087 = vmatpush1.bf16.msra.mxu0 0
        %1088 = vmatprep.subr.bf16.mxu0 0
        %1089 = vmatpush1.bf16.msra.mxu0 0
        %1090 = vmatprep.subr.bf16.mxu0 0
        %1091 = vmatpush1.bf16.msra.mxu0 0
        %1092 = vmatprep.subr.bf16.mxu0 0
        %1093 = vmatpush1.bf16.msra.mxu0 0
        %1094 = vmatprep.subr.bf16.mxu0 0
        %1095 = vmatpush1.bf16.msra.mxu0 0
        %1096 = vmatprep.subr.bf16.mxu0 0
        %1097 = vmatpush1.bf16.msra.mxu0 0
        %1098 = vmatprep.subr.bf16.mxu0 0
        %1099 = vmatpush1.bf16.msra.mxu0 0
        %1100 = vmatprep.subr.bf16.mxu0 0
        %1101 = vmatpush1.bf16.msra.mxu0 0
        %1102 = vmatprep.subr.bf16.mxu0 0
        %1103 = vmatpush1.bf16.msra.mxu0 0
        %1104 = vmatprep.subr.bf16.mxu0 0
        %1105 = vmatpush1.bf16.msra.mxu0 0
        %1106 = vmatprep.subr.bf16.mxu0 0
        %1107 = vmatpush1.bf16.msra.mxu0 0
        %1108 = vmatprep.subr.bf16.mxu0 0
        %1109 = vmatpush1.bf16.msra.mxu0 0
        %1110 = vmatprep.mubr.bf16.mxu0 0
        %1111 = vmatmul.mubr.bf16.gmra.mrb[0].mxu0 %v1072
        %v1112 = vpop.f32.mrb[0].mxu0
        %v1113 = vadd.f32 0.0, %v1112
        %v1114 = vpop.f32.mrb[0].mxu0
        %v1115 = vpop.f32.mrb[0].mxu0
        %v1116 = vpop.f32.mrb[0].mxu0
        %1117 = vdwg.mxu0
        %v1119 = vsel %vm1022, %v1068, 0
        %v1122 = vsel %vm1074, %v826, 0
        %1124 = vmatprep.subr.bf16.mxu0 0
        %1125 = vmatpush1.bf16.msra.mxu0 %v1122
        %1126 = vmatprep.subr.bf16.mxu0 0
        %1127 = vmatpush1.bf16.msra.mxu0 0
        %1128 = vmatprep.subr.bf16.mxu0 0
        %1129 = vmatpush1.bf16.msra.mxu0 0
        %1130 = vmatprep.subr.bf16.mxu0 0
        %1131 = vmatpush1.bf16.msra.mxu0 0
        %1132 = vmatprep.subr.bf16.mxu0 0
        %1133 = vmatpush1.bf16.msra.mxu0 0
        %1134 = vmatprep.subr.bf16.mxu0 0
        %1135 = vmatpush1.bf16.msra.mxu0 0
        %1136 = vmatprep.subr.bf16.mxu0 0
        %1137 = vmatpush1.bf16.msra.mxu0 0
        %1138 = vmatprep.subr.bf16.mxu0 0
        %1139 = vmatpush1.bf16.msra.mxu0 0
        %1140 = vmatprep.subr.bf16.mxu0 0
        %1141 = vmatpush1.bf16.msra.mxu0 0
        %1142 = vmatprep.subr.bf16.mxu0 0
        %1143 = vmatpush1.bf16.msra.mxu0 0
        %1144 = vmatprep.subr.bf16.mxu0 0
        %1145 = vmatpush1.bf16.msra.mxu0 0
        %1146 = vmatprep.subr.bf16.mxu0 0
        %1147 = vmatpush1.bf16.msra.mxu0 0
        %1148 = vmatprep.subr.bf16.mxu0 0
        %1149 = vmatpush1.bf16.msra.mxu0 0
        %1150 = vmatprep.subr.bf16.mxu0 0
        %1151 = vmatpush1.bf16.msra.mxu0 0
        %1152 = vmatprep.subr.bf16.mxu0 0
        %1153 = vmatpush1.bf16.msra.mxu0 0
        %1154 = vmatprep.subr.bf16.mxu0 0
        %1155 = vmatpush1.bf16.msra.mxu0 0
        %1156 = vmatprep.mubr.bf16.mxu0 0
        %1157 = vmatmul.mubr.bf16.gmra.mrb[0].mxu0 %v1119
        %v1158 = vpop.f32.mrb[0].mxu0
        %v1159 = vadd.f32 0.0, %v1158
        %v1160 = vpop.f32.mrb[0].mxu0
        %v1161 = vpop.f32.mrb[0].mxu0
        %v1162 = vpop.f32.mrb[0].mxu0
        %1163 = vdwg.mxu0
        %v1165 = vsel %vm1022, %v1069, 0
        %v1168 = vsel %vm1074, %v827, 0
        %1170 = vmatprep.subr.bf16.mxu0 0
        %1171 = vmatpush1.bf16.msra.mxu0 %v1168
        %1172 = vmatprep.subr.bf16.mxu0 0
        %1173 = vmatpush1.bf16.msra.mxu0 0
        %1174 = vmatprep.subr.bf16.mxu0 0
        %1175 = vmatpush1.bf16.msra.mxu0 0
        %1176 = vmatprep.subr.bf16.mxu0 0
        %1177 = vmatpush1.bf16.msra.mxu0 0
        %1178 = vmatprep.subr.bf16.mxu0 0
        %1179 = vmatpush1.bf16.msra.mxu0 0
        %1180 = vmatprep.subr.bf16.mxu0 0
        %1181 = vmatpush1.bf16.msra.mxu0 0
        %1182 = vmatprep.subr.bf16.mxu0 0
        %1183 = vmatpush1.bf16.msra.mxu0 0
        %1184 = vmatprep.subr.bf16.mxu0 0
        %1185 = vmatpush1.bf16.msra.mxu0 0
        %1186 = vmatprep.subr.bf16.mxu0 0
        %1187 = vmatpush1.bf16.msra.mxu0 0
        %1188 = vmatprep.subr.bf16.mxu0 0
        %1189 = vmatpush1.bf16.msra.mxu0 0
        %1190 = vmatprep.subr.bf16.mxu0 0
        %1191 = vmatpush1.bf16.msra.mxu0 0
        %1192 = vmatprep.subr.bf16.mxu0 0
        %1193 = vmatpush1.bf16.msra.mxu0 0
        %1194 = vmatprep.subr.bf16.mxu0 0
        %1195 = vmatpush1.bf16.msra.mxu0 0
        %1196 = vmatprep.subr.bf16.mxu0 0
        %1197 = vmatpush1.bf16.msra.mxu0 0
        %1198 = vmatprep.subr.bf16.mxu0 0
        %1199 = vmatpush1.bf16.msra.mxu0 0
        %1200 = vmatprep.subr.bf16.mxu0 0
        %1201 = vmatpush1.bf16.msra.mxu0 0
        %1202 = vmatprep.mubr.bf16.mxu0 0
        %1203 = vmatmul.mubr.bf16.gmra.mrb[0].mxu0 %v1165
        %v1204 = vpop.f32.mrb[0].mxu0
        %v1205 = vadd.f32 0.0, %v1204
        %v1206 = vpop.f32.mrb[0].mxu0
        %v1207 = vpop.f32.mrb[0].mxu0
        %v1208 = vpop.f32.mrb[0].mxu0
        %1209 = vdwg.mxu0
        %v1211 = vsel %vm1022, %v1070, 0
        %v1214 = vsel %vm1074, %v828, 0
        %1216 = vmatprep.subr.bf16.mxu0 0
        %1217 = vmatpush1.bf16.msra.mxu0 %v1214
        %1218 = vmatprep.subr.bf16.mxu0 0
        %1219 = vmatpush1.bf16.msra.mxu0 0
        %1220 = vmatprep.subr.bf16.mxu0 0
        %1221 = vmatpush1.bf16.msra.mxu0 0
        %1222 = vmatprep.subr.bf16.mxu0 0
        %1223 = vmatpush1.bf16.msra.mxu0 0
        %1224 = vmatprep.subr.bf16.mxu0 0
        %1225 = vmatpush1.bf16.msra.mxu0 0
        %1226 = vmatprep.subr.bf16.mxu0 0
        %1227 = vmatpush1.bf16.msra.mxu0 0
        %1228 = vmatprep.subr.bf16.mxu0 0
        %1229 = vmatpush1.bf16.msra.mxu0 0
        %1230 = vmatprep.subr.bf16.mxu0 0
        %1231 = vmatpush1.bf16.msra.mxu0 0
        %1232 = vmatprep.subr.bf16.mxu0 0
        %1233 = vmatpush1.bf16.msra.mxu0 0
        %1234 = vmatprep.subr.bf16.mxu0 0
        %1235 = vmatpush1.bf16.msra.mxu0 0
        %1236 = vmatprep.subr.bf16.mxu0 0
        %1237 = vmatpush1.bf16.msra.mxu0 0
        %1238 = vmatprep.subr.bf16.mxu0 0
        %1239 = vmatpush1.bf16.msra.mxu0 0
        %1240 = vmatprep.subr.bf16.mxu0 0
        %1241 = vmatpush1.bf16.msra.mxu0 0
        %1242 = vmatprep.subr.bf16.mxu0 0
        %1243 = vmatpush1.bf16.msra.mxu0 0
        %1244 = vmatprep.subr.bf16.mxu0 0
        %1245 = vmatpush1.bf16.msra.mxu0 0
        %1246 = vmatprep.subr.bf16.mxu0 0
        %1247 = vmatpush1.bf16.msra.mxu0 0
        %1248 = vmatprep.mubr.bf16.mxu0 0
        %1249 = vmatmul.mubr.bf16.gmra.mrb[0].mxu0 %v1211
        %v1250 = vpop.f32.mrb[0].mxu0
        %v1251 = vadd.f32 0.0, %v1250
        %v1252 = vpop.f32.mrb[0].mxu0
        %v1253 = vpop.f32.mrb[0].mxu0
        %v1254 = vpop.f32.mrb[0].mxu0
        %1255 = vdwg.mxu0
        %1257 = vrot.lane.b32.xlu0 %v1159, 32
        %v1258 = vpop.permute.xlu0 %1257
        %1261 = vrot.lane.b32.xlu0 %v1205, 64
        %v1262 = vpop.permute.xlu0 %1261
        %1265 = vrot.lane.b32.xlu0 %v1251, 96
        %v1266 = vpop.permute.xlu0 %1265
        %v1268 = vsel %vm829, %v1113, %v1258
        %vm1269 = vcmask 523264
        %v1270 = vsel %vm1269, %v1268, %v1262
        %vm1271 = vcmask 785408
        %v1272 = vsel %vm1271, %v1270, %v1266
        %v1273 = vpack.c.bf16 %v1272, %v1272
        %v1274 = vld [vmem:[%s424] sm:$0xf]
        %v1275 = vld [vmem:[%s424 + $0x4] sm:$0xf]
        %v1276 = vld [vmem:[%s424 + $0x8] sm:$0xf]
        %v1277 = vld [vmem:[%s424 + $0xc] sm:$0xf]
        %v1278 = vld [vmem:[%s424 + $0x10] sm:$0xf]
        %v1279 = vld [vmem:[%s424 + $0x14] sm:$0xf]
        %v1280 = vld [vmem:[%s424 + $0x18] sm:$0xf]
        %v1281 = vld [vmem:[%s424 + $0x1c] sm:$0xf]
        %v1282 = vld [vmem:[%s424 + $0x20] sm:$0xf]
        %v1283 = vld [vmem:[%s424 + $0x24] sm:$0xf]
        %v1284 = vld [vmem:[%s424 + $0x28] sm:$0xf]
        %v1285 = vld [vmem:[%s424 + $0x2c] sm:$0xf]
        %v1286 = vld [vmem:[%s424 + $0x30] sm:$0xf]
        %v1287 = vld [vmem:[%s424 + $0x34] sm:$0xf]
        %v1288 = vld [vmem:[%s424 + $0x38] sm:$0xf]
        %v1289 = vld [vmem:[%s424 + $0x3c] sm:$0xf]
        %v1290 = vlaneseq
        %v1291 = vshrl.u32 %v1290, 7
        %v1292 = vsub.s32 5, %v1291
        %v1293 = vrot.slane %v507, %v1292
        %v1310 = vunpack.c.l.b16 %v1274
        %v1311 = vunpack.c.l.b16 %v1275
        %v1312 = vunpack.c.l.b16 %v1276
        %v1313 = vunpack.c.l.b16 %v1277
        %v1314 = vunpack.c.l.b16 %v1278
        %v1315 = vunpack.c.l.b16 %v1279
        %v1316 = vunpack.c.l.b16 %v1280
        %v1317 = vunpack.c.l.b16 %v1281
        %v1318 = vunpack.c.l.b16 %v1282
        %v1319 = vunpack.c.l.b16 %v1283
        %v1320 = vunpack.c.l.b16 %v1284
        %v1321 = vunpack.c.l.b16 %v1285
        %v1322 = vunpack.c.l.b16 %v1286
        %v1323 = vunpack.c.l.b16 %v1287
        %v1324 = vunpack.c.l.b16 %v1288
        %v1325 = vunpack.c.l.b16 %v1289
        %v1326 = vpack.c.b16 %v1311, %v1310
        %v1327 = vpack.c.b16 %v1313, %v1312
        %v1328 = vpack.c.b16 %v1315, %v1314
        %v1329 = vpack.c.b16 %v1317, %v1316
        %v1330 = vpack.c.b16 %v1319, %v1318
        %v1331 = vpack.c.b16 %v1321, %v1320
        %v1332 = vpack.c.b16 %v1323, %v1322
        %v1333 = vpack.c.b16 %v1325, %v1324
        %1342 = vmatprep.subr.bf16.mxu0 0
        %1343 = vmatpush1.bf16.msra.mxu0 %v1326
        %1344 = vmatprep.subr.bf16.mxu0 0
        %1345 = vmatpush1.bf16.msra.mxu0 %v1327
        %1346 = vmatprep.subr.bf16.mxu0 0
        %1347 = vmatpush1.bf16.msra.mxu0 %v1328
        %1348 = vmatprep.subr.bf16.mxu0 0
        %1349 = vmatpush1.bf16.msra.mxu0 %v1329
        %1350 = vmatprep.subr.bf16.mxu0 0
        %1351 = vmatpush1.bf16.msra.mxu0 %v1330
        %1352 = vmatprep.subr.bf16.mxu0 0
        %1353 = vmatpush1.bf16.msra.mxu0 %v1331
        %1354 = vmatprep.subr.bf16.mxu0 0
        %1355 = vmatpush1.bf16.msra.mxu0 %v1332
        %1356 = vmatprep.subr.bf16.mxu0 0
        %1357 = vmatpush1.bf16.msra.mxu0 %v1333
        %1358 = vmatprep.subr.bf16.mxu0 0
        %1359 = vmatpush1.bf16.msra.mxu0 0
        %1360 = vmatprep.subr.bf16.mxu0 0
        %1361 = vmatpush1.bf16.msra.mxu0 0
        %1362 = vmatprep.subr.bf16.mxu0 0
        %1363 = vmatpush1.bf16.msra.mxu0 0
        %1364 = vmatprep.subr.bf16.mxu0 0
        %1365 = vmatpush1.bf16.msra.mxu0 0
        %1366 = vmatprep.subr.bf16.mxu0 0
        %1367 = vmatpush1.bf16.msra.mxu0 0
        %1368 = vmatprep.subr.bf16.mxu0 0
        %1369 = vmatpush1.bf16.msra.mxu0 0
        %1370 = vmatprep.subr.bf16.mxu0 0
        %1371 = vmatpush1.bf16.msra.mxu0 0
        %1372 = vmatprep.subr.bf16.mxu0 0
        %1373 = vmatpush1.bf16.msra.mxu0 0
        %1374 = vmatprep.mubr.bf16.mxu0 0
        %1375 = vmatmul.mubr.bf16.gmra.mrb[0].mxu0 %v1273
        %v1376 = vpop.f32.mrb[0].mxu0
        %v1377 = vadd.f32 %v1293, %v1376
        %v1378 = vpop.f32.mrb[0].mxu0
        %v1379 = vpop.f32.mrb[0].mxu0
        %v1380 = vpop.f32.mrb[0].mxu0
        %1381 = vdwg.mxu0
        %v1382 = vadd.f32 %v505, %v1377
        %1383 = vadd.xlane.f32.xlu0 %v1382
        %v1384 = vpop.xlane.xlu0 %1383
        %v1385 = vmul.f32 %v1384, %v513
        %v1386 = vsub.f32 %v1382, %v1385
        %v1387 = vmul.f32 %v1386, %v1386
        %1388 = vadd.xlane.f32.xlu0 %v1387
        %v1389 = vpop.xlane.xlu0 %1388
        %v1390 = vmul.f32 %v1389, %v513
        %v1391 = vadd.f32 %v1390, 1e-05
        %v1392 = vrsqrt.pop %v1391
        %v1393 = vmul.f32 %v1386, %v1392
        %v1394 = vlaneseq
        %v1395 = vshrl.u32 %v1394, 7
        %v1396 = vsub.s32 2, %v1395
        %v1397 = vrot.slane %v507, %v1396
        %v1398 = vmul.f32 %v1393, %v1397
        %v1399 = vlaneseq
        %v1400 = vshrl.u32 %v1399, 7
        %v1401 = vsub.s32 3, %v1400
        %v1402 = vrot.slane %v507, %v1401
        %v1403 = vadd.f32 %v1398, %v1402
        %v1404 = vpack.c.bf16 %v1403, %v1403
        %v1405 = vld [vmem:[%s433] sm:$0xff]
        %v1406 = vld [vmem:[%s433 + $0x8] sm:$0xff]
        %v1407 = vld [vmem:[%s433 + $0x10] sm:$0xff]
        %v1408 = vld [vmem:[%s433 + $0x18] sm:$0xff]
        %v1409 = vld [vmem:[%s433 + $0x20] sm:$0xff]
        %v1410 = vld [vmem:[%s433 + $0x28] sm:$0xff]
        %v1411 = vld [vmem:[%s433 + $0x30] sm:$0xff]
        %v1412 = vld [vmem:[%s433 + $0x38] sm:$0xff]
        %v1413 = vld [vmem:[%s433 + $0x40] sm:$0xff]
        %v1414 = vld [vmem:[%s433 + $0x48] sm:$0xff]
        %v1415 = vld [vmem:[%s433 + $0x50] sm:$0xff]
        %v1416 = vld [vmem:[%s433 + $0x58] sm:$0xff]
        %v1417 = vld [vmem:[%s433 + $0x60] sm:$0xff]
        %v1418 = vld [vmem:[%s433 + $0x68] sm:$0xff]
        %v1419 = vld [vmem:[%s433 + $0x70] sm:$0xff]
        %v1420 = vld [vmem:[%s433 + $0x78] sm:$0xff]
        %v1421 = vld [vmem:[%s433 + $0x80] sm:$0xff]
        %v1422 = vld [vmem:[%s433 + $0x88] sm:$0xff]
        %v1423 = vld [vmem:[%s433 + $0x90] sm:$0xff]
        %v1424 = vld [vmem:[%s433 + $0x98] sm:$0xff]
        %v1425 = vld [vmem:[%s433 + $0xa0] sm:$0xff]
        %v1426 = vld [vmem:[%s433 + $0xa8] sm:$0xff]
        %v1427 = vld [vmem:[%s433 + $0xb0] sm:$0xff]
        %v1428 = vld [vmem:[%s433 + $0xb8] sm:$0xff]
        %v1429 = vld [vmem:[%s433 + $0xc0] sm:$0xff]
        %v1430 = vld [vmem:[%s433 + $0xc8] sm:$0xff]
        %v1431 = vld [vmem:[%s433 + $0xd0] sm:$0xff]
        %v1432 = vld [vmem:[%s433 + $0xd8] sm:$0xff]
        %v1433 = vld [vmem:[%s433 + $0xe0] sm:$0xff]
        %v1434 = vld [vmem:[%s433 + $0xe8] sm:$0xff]
        %v1435 = vld [vmem:[%s433 + $0xf0] sm:$0xff]
        %v1436 = vld [vmem:[%s433 + $0xf8] sm:$0xff]
        %v1437 = vlaneseq
        %v1438 = vshrl.u32 %v1437, 7
        %v1439 = vsub.s32 6, %v1438
        %v1440 = vrot.slane %v507, %v1439
        %v1441 = vlaneseq
        %v1442 = vshrl.u32 %v1441, 7
        %v1443 = vsub.s32 6, %v1442
        %v1444 = vrot.slane %v508, %v1443
        %v1445 = vlaneseq
        %v1446 = vshrl.u32 %v1445, 7
        %v1447 = vsub.s32 6, %v1446
        %v1448 = vrot.slane %v509, %v1447
        %v1449 = vlaneseq
        %v1450 = vshrl.u32 %v1449, 7
        %v1451 = vsub.s32 6, %v1450
        %v1452 = vrot.slane %v510, %v1451
        %v1485 = vunpack.c.l.b16 %v1405
        %v1486 = vunpack.c.h.b16 %v1405
        %v1487 = vunpack.c.l.b16 %v1406
        %v1488 = vunpack.c.h.b16 %v1406
        %v1489 = vunpack.c.l.b16 %v1407
        %v1490 = vunpack.c.h.b16 %v1407
        %v1491 = vunpack.c.l.b16 %v1408
        %v1492 = vunpack.c.h.b16 %v1408
        %v1493 = vunpack.c.l.b16 %v1409
        %v1494 = vunpack.c.h.b16 %v1409
        %v1495 = vunpack.c.l.b16 %v1410
        %v1496 = vunpack.c.h.b16 %v1410
        %v1497 = vunpack.c.l.b16 %v1411
        %v1498 = vunpack.c.h.b16 %v1411
        %v1499 = vunpack.c.l.b16 %v1412
        %v1500 = vunpack.c.h.b16 %v1412
        %v1501 = vunpack.c.l.b16 %v1413
        %v1502 = vunpack.c.h.b16 %v1413
        %v1503 = vunpack.c.l.b16 %v1414
        %v1504 = vunpack.c.h.b16 %v1414
        %v1505 = vunpack.c.l.b16 %v1415
        %v1506 = vunpack.c.h.b16 %v1415
        %v1507 = vunpack.c.l.b16 %v1416
        %v1508 = vunpack.c.h.b16 %v1416
        %v1509 = vunpack.c.l.b16 %v1417
        %v1510 = vunpack.c.h.b16 %v1417
        %v1511 = vunpack.c.l.b16 %v1418
        %v1512 = vunpack.c.h.b16 %v1418
        %v1513 = vunpack.c.l.b16 %v1419
        %v1514 = vunpack.c.h.b16 %v1419
        %v1515 = vunpack.c.l.b16 %v1420
        %v1516 = vunpack.c.h.b16 %v1420
        %v1517 = vunpack.c.l.b16 %v1421
        %v1518 = vunpack.c.h.b16 %v1421
        %v1519 = vunpack.c.l.b16 %v1422
        %v1520 = vunpack.c.h.b16 %v1422
        %v1521 = vunpack.c.l.b16 %v1423
        %v1522 = vunpack.c.h.b16 %v1423
        %v1523 = vunpack.c.l.b16 %v1424
        %v1524 = vunpack.c.h.b16 %v1424
        %v1525 = vunpack.c.l.b16 %v1425
        %v1526 = vunpack.c.h.b16 %v1425
        %v1527 = vunpack.c.l.b16 %v1426
        %v1528 = vunpack.c.h.b16 %v1426
        %v1529 = vunpack.c.l.b16 %v1427
        %v1530 = vunpack.c.h.b16 %v1427
        %v1531 = vunpack.c.l.b16 %v1428
        %v1532 = vunpack.c.h.b16 %v1428
        %v1533 = vunpack.c.l.b16 %v1429
        %v1534 = vunpack.c.h.b16 %v1429
        %v1535 = vunpack.c.l.b16 %v1430
        %v1536 = vunpack.c.h.b16 %v1430
        %v1537 = vunpack.c.l.b16 %v1431
        %v1538 = vunpack.c.h.b16 %v1431
        %v1539 = vunpack.c.l.b16 %v1432
        %v1540 = vunpack.c.h.b16 %v1432
        %v1541 = vunpack.c.l.b16 %v1433
        %v1542 = vunpack.c.h.b16 %v1433
        %v1543 = vunpack.c.l.b16 %v1434
        %v1544 = vunpack.c.h.b16 %v1434
        %v1545 = vunpack.c.l.b16 %v1435
        %v1546 = vunpack.c.h.b16 %v1435
        %v1547 = vunpack.c.l.b16 %v1436
        %v1548 = vunpack.c.h.b16 %v1436
        %v1549 = vpack.c.b16 %v1489, %v1485
        %v1550 = vpack.c.b16 %v1490, %v1486
        %v1551 = vpack.c.b16 %v1491, %v1487
        %v1552 = vpack.c.b16 %v1492, %v1488
        %v1553 = vpack.c.b16 %v1497, %v1493
        %v1554 = vpack.c.b16 %v1498, %v1494
        %v1555 = vpack.c.b16 %v1499, %v1495
        %v1556 = vpack.c.b16 %v1500, %v1496
        %v1557 = vpack.c.b16 %v1505, %v1501
        %v1558 = vpack.c.b16 %v1506, %v1502
        %v1559 = vpack.c.b16 %v1507, %v1503
        %v1560 = vpack.c.b16 %v1508, %v1504
        %v1561 = vpack.c.b16 %v1513, %v1509
        %v1562 = vpack.c.b16 %v1514, %v1510
        %v1563 = vpack.c.b16 %v1515, %v1511
        %v1564 = vpack.c.b16 %v1516, %v1512
        %v1565 = vpack.c.b16 %v1521, %v1517
        %v1566 = vpack.c.b16 %v1522, %v1518
        %v1567 = vpack.c.b16 %v1523, %v1519
        %v1568 = vpack.c.b16 %v1524, %v1520
        %v1569 = vpack.c.b16 %v1529, %v1525
        %v1570 = vpack.c.b16 %v1530, %v1526
        %v1571 = vpack.c.b16 %v1531, %v1527
        %v1572 = vpack.c.b16 %v1532, %v1528
        %v1573 = vpack.c.b16 %v1537, %v1533
        %v1574 = vpack.c.b16 %v1538, %v1534
        %v1575 = vpack.c.b16 %v1539, %v1535
        %v1576 = vpack.c.b16 %v1540, %v1536
        %v1577 = vpack.c.b16 %v1545, %v1541
        %v1578 = vpack.c.b16 %v1546, %v1542
        %v1579 = vpack.c.b16 %v1547, %v1543
        %v1580 = vpack.c.b16 %v1548, %v1544
        %1613 = vmatprep.subr.bf16.mxu0 %v1550
        %1614 = vmatpush1.bf16.msra.mxu0 %v1549
        %1615 = vmatprep.subr.bf16.mxu0 %v1554
        %1616 = vmatpush1.bf16.msra.mxu0 %v1553
        %1617 = vmatprep.subr.bf16.mxu0 %v1558
        %1618 = vmatpush1.bf16.msra.mxu0 %v1557
        %1619 = vmatprep.subr.bf16.mxu0 %v1562
        %1620 = vmatpush1.bf16.msra.mxu0 %v1561
        %1621 = vmatprep.subr.bf16.mxu0 %v1566
        %1622 = vmatpush1.bf16.msra.mxu0 %v1565
        %1623 = vmatprep.subr.bf16.mxu0 %v1570
        %1624 = vmatpush1.bf16.msra.mxu0 %v1569
        %1625 = vmatprep.subr.bf16.mxu0 %v1574
        %1626 = vmatpush1.bf16.msra.mxu0 %v1573
        %1627 = vmatprep.subr.bf16.mxu0 %v1578
        %1628 = vmatpush1.bf16.msra.mxu0 %v1577
        %1629 = vmatprep.subr.bf16.mxu0 0
        %1630 = vmatpush1.bf16.msra.mxu0 0
        %1631 = vmatprep.subr.bf16.mxu0 0
        %1632 = vmatpush1.bf16.msra.mxu0 0
        %1633 = vmatprep.subr.bf16.mxu0 0
        %1634 = vmatpush1.bf16.msra.mxu0 0
        %1635 = vmatprep.subr.bf16.mxu0 0
        %1636 = vmatpush1.bf16.msra.mxu0 0
        %1637 = vmatprep.subr.bf16.mxu0 0
        %1638 = vmatpush1.bf16.msra.mxu0 0
        %1639 = vmatprep.subr.bf16.mxu0 0
        %1640 = vmatpush1.bf16.msra.mxu0 0
        %1641 = vmatprep.subr.bf16.mxu0 0
        %1642 = vmatpush1.bf16.msra.mxu0 0
        %1643 = vmatprep.subr.bf16.mxu0 0
        %1644 = vmatpush1.bf16.msra.mxu0 0
        %1645 = vmatprep.mubr.bf16.mxu0 0
        %1646 = vmatmul.mubr.bf16.gmra.mrb[0].mxu0 %v1404
        %v1647 = vpop.f32.mrb[0].mxu0
        %v1648 = vadd.f32 %v1440, %v1647
        %v1649 = vpop.f32.mrb[0].mxu0
        %v1650 = vadd.f32 %v1444, %v1649
        %v1651 = vpop.f32.mrb[0].mxu0
        %v1652 = vpop.f32.mrb[0].mxu0
        %1653 = vdwg.mxu0
        %1654 = vmatprep.subr.bf16.mxu0 %v1552
        %1655 = vmatpush1.bf16.msra.mxu0 %v1551
        %1656 = vmatprep.subr.bf16.mxu0 %v1556
        %1657 = vmatpush1.bf16.msra.mxu0 %v1555
        %1658 = vmatprep.subr.bf16.mxu0 %v1560
        %1659 = vmatpush1.bf16.msra.mxu0 %v1559
        %1660 = vmatprep.subr.bf16.mxu0 %v1564
        %1661 = vmatpush1.bf16.msra.mxu0 %v1563
        %1662 = vmatprep.subr.bf16.mxu0 %v1568
        %1663 = vmatpush1.bf16.msra.mxu0 %v1567
        %1664 = vmatprep.subr.bf16.mxu0 %v1572
        %1665 = vmatpush1.bf16.msra.mxu0 %v1571
        %1666 = vmatprep.subr.bf16.mxu0 %v1576
        %1667 = vmatpush1.bf16.msra.mxu0 %v1575
        %1668 = vmatprep.subr.bf16.mxu0 %v1580
        %1669 = vmatpush1.bf16.msra.mxu0 %v1579
        %1670 = vmatprep.subr.bf16.mxu0 0
        %1671 = vmatpush1.bf16.msra.mxu0 0
        %1672 = vmatprep.subr.bf16.mxu0 0
        %1673 = vmatpush1.bf16.msra.mxu0 0
        %1674 = vmatprep.subr.bf16.mxu0 0
        %1675 = vmatpush1.bf16.msra.mxu0 0
        %1676 = vmatprep.subr.bf16.mxu0 0
        %1677 = vmatpush1.bf16.msra.mxu0 0
        %1678 = vmatprep.subr.bf16.mxu0 0
        %1679 = vmatpush1.bf16.msra.mxu0 0
        %1680 = vmatprep.subr.bf16.mxu0 0
        %1681 = vmatpush1.bf16.msra.mxu0 0
        %1682 = vmatprep.subr.bf16.mxu0 0
        %1683 = vmatpush1.bf16.msra.mxu0 0
        %1684 = vmatprep.subr.bf16.mxu0 0
        %1685 = vmatpush1.bf16.msra.mxu0 0
        %1686 = vmatprep.mubr.bf16.mxu0 0
        %1687 = vmatmul.mubr.bf16.gmra.mrb[0].mxu0 %v1404
        %v1688 = vpop.f32.mrb[0].mxu0
        %v1689 = vadd.f32 %v1448, %v1688
        %v1690 = vpop.f32.mrb[0].mxu0
        %v1691 = vadd.f32 %v1452, %v1690
        %v1692 = vpop.f32.mrb[0].mxu0
        %v1693 = vpop.f32.mrb[0].mxu0
        %1694 = vdwg.mxu0
        %v1695 = vmul.f32 %v1648, 1.702
        %v1696 = vmul.f32 %v1650, 1.702
        %v1697 = vmul.f32 %v1689, 1.702
        %v1698 = vmul.f32 %v1691, 1.702
        %v1699 = vxor.u32 %v1695, 2147483648
        %v1700 = vxor.u32 %v1696, 2147483648
        %v1701 = vxor.u32 %v1697, 2147483648
        %v1702 = vxor.u32 %v1698, 2147483648
        %v1703 = vmul.f32 %v1699, 1.442695
        %v1704 = vpow.pop %v1703
        %v1705 = vmul.f32 %v1700, 1.442695
        %v1706 = vpow.pop %v1705
        %v1707 = vmul.f32 %v1701, 1.442695
        %v1708 = vpow.pop %v1707
        %v1709 = vmul.f32 %v1702, 1.442695
        %v1710 = vpow.pop %v1709
        %v1711 = vadd.f32 %v1704, 1.0
        %v1712 = vadd.f32 %v1706, 1.0
        %v1713 = vadd.f32 %v1708, 1.0
        %v1714 = vadd.f32 %v1710, 1.0
        %v1715 = vrcp.pop %v1711
        %v1716 = vmul.f32 1.0, %v1715
        %v1717 = vrcp.pop %v1712
        %v1718 = vmul.f32 1.0, %v1717
        %v1719 = vrcp.pop %v1713
        %v1720 = vmul.f32 1.0, %v1719
        %v1721 = vrcp.pop %v1714
        %v1722 = vmul.f32 1.0, %v1721
        %v1723 = vmul.f32 %v1648, %v1716
        %v1724 = vmul.f32 %v1650, %v1718
        %v1725 = vmul.f32 %v1689, %v1720
        %v1726 = vmul.f32 %v1691, %v1722
        %v1727 = vpack.c.bf16 %v1723, %v1723
        %v1728 = vpack.c.bf16 %v1724, %v1724
        %v1729 = vpack.c.bf16 %v1725, %v1725
        %v1730 = vpack.c.bf16 %v1726, %v1726
        %v1731 = vld [vmem:[%s442] sm:$0xf]
        %v1732 = vld [vmem:[%s442 + $0x4] sm:$0xf]
        %v1733 = vld [vmem:[%s442 + $0x8] sm:$0xf]
        %v1734 = vld [vmem:[%s442 + $0xc] sm:$0xf]
        %v1735 = vld [vmem:[%s442 + $0x10] sm:$0xf]
        %v1736 = vld [vmem:[%s442 + $0x14] sm:$0xf]
        %v1737 = vld [vmem:[%s442 + $0x18] sm:$0xf]
        %v1738 = vld [vmem:[%s442 + $0x1c] sm:$0xf]
        %v1739 = vld [vmem:[%s442 + $0x20] sm:$0xf]
        %v1740 = vld [vmem:[%s442 + $0x24] sm:$0xf]
        %v1741 = vld [vmem:[%s442 + $0x28] sm:$0xf]
        %v1742 = vld [vmem:[%s442 + $0x2c] sm:$0xf]
        %v1743 = vld [vmem:[%s442 + $0x30] sm:$0xf]
        %v1744 = vld [vmem:[%s442 + $0x34] sm:$0xf]
        %v1745 = vld [vmem:[%s442 + $0x38] sm:$0xf]
        %v1746 = vld [vmem:[%s442 + $0x3c] sm:$0xf]
        %v1747 = vld [vmem:[%s442 + $0x40] sm:$0xf]
        %v1748 = vld [vmem:[%s442 + $0x44] sm:$0xf]
        %v1749 = vld [vmem:[%s442 + $0x48] sm:$0xf]
        %v1750 = vld [vmem:[%s442 + $0x4c] sm:$0xf]
        %v1751 = vld [vmem:[%s442 + $0x50] sm:$0xf]
        %v1752 = vld [vmem:[%s442 + $0x54] sm:$0xf]
        %v1753 = vld [vmem:[%s442 + $0x58] sm:$0xf]
        %v1754 = vld [vmem:[%s442 + $0x5c] sm:$0xf]
        %v1755 = vld [vmem:[%s442 + $0x60] sm:$0xf]
        %v1756 = vld [vmem:[%s442 + $0x64] sm:$0xf]
        %v1757 = vld [vmem:[%s442 + $0x68] sm:$0xf]
        %v1758 = vld [vmem:[%s442 + $0x6c] sm:$0xf]
        %v1759 = vld [vmem:[%s442 + $0x70] sm:$0xf]
        %v1760 = vld [vmem:[%s442 + $0x74] sm:$0xf]
        %v1761 = vld [vmem:[%s442 + $0x78] sm:$0xf]
        %v1762 = vld [vmem:[%s442 + $0x7c] sm:$0xf]
        %v1763 = vld [vmem:[%s442 + $0x80] sm:$0xf]
        %v1764 = vld [vmem:[%s442 + $0x84] sm:$0xf]
        %v1765 = vld [vmem:[%s442 + $0x88] sm:$0xf]
        %v1766 = vld [vmem:[%s442 + $0x8c] sm:$0xf]
        %v1767 = vld [vmem:[%s442 + $0x90] sm:$0xf]
        %v1768 = vld [vmem:[%s442 + $0x94] sm:$0xf]
        %v1769 = vld [vmem:[%s442 + $0x98] sm:$0xf]
        %v1770 = vld [vmem:[%s442 + $0x9c] sm:$0xf]
        %v1771 = vld [vmem:[%s442 + $0xa0] sm:$0xf]
        %v1772 = vld [vmem:[%s442 + $0xa4] sm:$0xf]
        %v1773 = vld [vmem:[%s442 + $0xa8] sm:$0xf]
        %v1774 = vld [vmem:[%s442 + $0xac] sm:$0xf]
        %v1775 = vld [vmem:[%s442 + $0xb0] sm:$0xf]
        %v1776 = vld [vmem:[%s442 + $0xb4] sm:$0xf]
        %v1777 = vld [vmem:[%s442 + $0xb8] sm:$0xf]
        %v1778 = vld [vmem:[%s442 + $0xbc] sm:$0xf]
        %v1779 = vld [vmem:[%s442 + $0xc0] sm:$0xf]
        %v1780 = vld [vmem:[%s442 + $0xc4] sm:$0xf]
        %v1781 = vld [vmem:[%s442 + $0xc8] sm:$0xf]
        %v1782 = vld [vmem:[%s442 + $0xcc] sm:$0xf]
        %v1783 = vld [vmem:[%s442 + $0xd0] sm:$0xf]
        %v1784 = vld [vmem:[%s442 + $0xd4] sm:$0xf]
        %v1785 = vld [vmem:[%s442 + $0xd8] sm:$0xf]
        %v1786 = vld [vmem:[%s442 + $0xdc] sm:$0xf]
        %v1787 = vld [vmem:[%s442 + $0xe0] sm:$0xf]
        %v1788 = vld [vmem:[%s442 + $0xe4] sm:$0xf]
        %v1789 = vld [vmem:[%s442 + $0xe8] sm:$0xf]
        %v1790 = vld [vmem:[%s442 + $0xec] sm:$0xf]
        %v1791 = vld [vmem:[%s442 + $0xf0] sm:$0xf]
        %v1792 = vld [vmem:[%s442 + $0xf4] sm:$0xf]
        %v1793 = vld [vmem:[%s442 + $0xf8] sm:$0xf]
        %v1794 = vld [vmem:[%s442 + $0xfc] sm:$0xf]
        %v1795 = vlaneseq
        %v1796 = vshrl.u32 %v1795, 7
        %v1797 = vsub.s32 7, %v1796
        %v1798 = vrot.slane %v507, %v1797
        %v1863 = vunpack.c.l.b16 %v1731
        %v1864 = vunpack.c.l.b16 %v1732
        %v1865 = vunpack.c.l.b16 %v1733
        %v1866 = vunpack.c.l.b16 %v1734
        %v1867 = vunpack.c.l.b16 %v1735
        %v1868 = vunpack.c.l.b16 %v1736
        %v1869 = vunpack.c.l.b16 %v1737
        %v1870 = vunpack.c.l.b16 %v1738
        %v1871 = vunpack.c.l.b16 %v1739
        %v1872 = vunpack.c.l.b16 %v1740
        %v1873 = vunpack.c.l.b16 %v1741
        %v1874 = vunpack.c.l.b16 %v1742
        %v1875 = vunpack.c.l.b16 %v1743
        %v1876 = vunpack.c.l.b16 %v1744
        %v1877 = vunpack.c.l.b16 %v1745
        %v1878 = vunpack.c.l.b16 %v1746
        %v1879 = vunpack.c.l.b16 %v1747
        %v1880 = vunpack.c.l.b16 %v1748
        %v1881 = vunpack.c.l.b16 %v1749
        %v1882 = vunpack.c.l.b16 %v1750
        %v1883 = vunpack.c.l.b16 %v1751
        %v1884 = vunpack.c.l.b16 %v1752
        %v1885 = vunpack.c.l.b16 %v1753
        %v1886 = vunpack.c.l.b16 %v1754
        %v1887 = vunpack.c.l.b16 %v1755
        %v1888 = vunpack.c.l.b16 %v1756
        %v1889 = vunpack.c.l.b16 %v1757
        %v1890 = vunpack.c.l.b16 %v1758
        %v1891 = vunpack.c.l.b16 %v1759
        %v1892 = vunpack.c.l.b16 %v1760
        %v1893 = vunpack.c.l.b16 %v1761
        %v1894 = vunpack.c.l.b16 %v1762
        %v1895 = vunpack.c.l.b16 %v1763
        %v1896 = vunpack.c.l.b16 %v1764
        %v1897 = vunpack.c.l.b16 %v1765
        %v1898 = vunpack.c.l.b16 %v1766
        %v1899 = vunpack.c.l.b16 %v1767
        %v1900 = vunpack.c.l.b16 %v1768
        %v1901 = vunpack.c.l.b16 %v1769
        %v1902 = vunpack.c.l.b16 %v1770
        %v1903 = vunpack.c.l.b16 %v1771
        %v1904 = vunpack.c.l.b16 %v1772
        %v1905 = vunpack.c.l.b16 %v1773
        %v1906 = vunpack.c.l.b16 %v1774
        %v1907 = vunpack.c.l.b16 %v1775
        %v1908 = vunpack.c.l.b16 %v1776
        %v1909 = vunpack.c.l.b16 %v1777
        %v1910 = vunpack.c.l.b16 %v1778
        %v1911 = vunpack.c.l.b16 %v1779
        %v1912 = vunpack.c.l.b16 %v1780
        %v1913 = vunpack.c.l.b16 %v1781
        %v1914 = vunpack.c.l.b16 %v1782
        %v1915 = vunpack.c.l.b16 %v1783
        %v1916 = vunpack.c.l.b16 %v1784
        %v1917 = vunpack.c.l.b16 %v1785
        %v1918 = vunpack.c.l.b16 %v1786
        %v1919 = vunpack.c.l.b16 %v1787
        %v1920 = vunpack.c.l.b16 %v1788
        %v1921 = vunpack.c.l.b16 %v1789
        %v1922 = vunpack.c.l.b16 %v1790
        %v1923 = vunpack.c.l.b16 %v1791
        %v1924 = vunpack.c.l.b16 %v1792
        %v1925 = vunpack.c.l.b16 %v1793
        %v1926 = vunpack.c.l.b16 %v1794
        %v1927 = vpack.c.b16 %v1864, %v1863
        %v1928 = vpack.c.b16 %v1866, %v1865
        %v1929 = vpack.c.b16 %v1868, %v1867
        %v1930 = vpack.c.b16 %v1870, %v1869
        %v1931 = vpack.c.b16 %v1872, %v1871
        %v1932 = vpack.c.b16 %v1874, %v1873
        %v1933 = vpack.c.b16 %v1876, %v1875
        %v1934 = vpack.c.b16 %v1878, %v1877
        %v1935 = vpack.c.b16 %v1880, %v1879
        %v1936 = vpack.c.b16 %v1882, %v1881
        %v1937 = vpack.c.b16 %v1884, %v1883
        %v1938 = vpack.c.b16 %v1886, %v1885
        %v1939 = vpack.c.b16 %v1888, %v1887
        %v1940 = vpack.c.b16 %v1890, %v1889
        %v1941 = vpack.c.b16 %v1892, %v1891
        %v1942 = vpack.c.b16 %v1894, %v1893
        %v1943 = vpack.c.b16 %v1896, %v1895
        %v1944 = vpack.c.b16 %v1898, %v1897
        %v1945 = vpack.c.b16 %v1900, %v1899
        %v1946 = vpack.c.b16 %v1902, %v1901
        %v1947 = vpack.c.b16 %v1904, %v1903
        %v1948 = vpack.c.b16 %v1906, %v1905
        %v1949 = vpack.c.b16 %v1908, %v1907
        %v1950 = vpack.c.b16 %v1910, %v1909
        %v1951 = vpack.c.b16 %v1912, %v1911
        %v1952 = vpack.c.b16 %v1914, %v1913
        %v1953 = vpack.c.b16 %v1916, %v1915
        %v1954 = vpack.c.b16 %v1918, %v1917
        %v1955 = vpack.c.b16 %v1920, %v1919
        %v1956 = vpack.c.b16 %v1922, %v1921
        %v1957 = vpack.c.b16 %v1924, %v1923
        %v1958 = vpack.c.b16 %v1926, %v1925
        %1991 = vmatprep.subr.bf16.mxu0 0
        %1992 = vmatpush1.bf16.msra.mxu0 %v1927
        %1993 = vmatprep.subr.bf16.mxu0 0
        %1994 = vmatpush1.bf16.msra.mxu0 %v1928
        %1995 = vmatprep.subr.bf16.mxu0 0
        %1996 = vmatpush1.bf16.msra.mxu0 %v1929
        %1997 = vmatprep.subr.bf16.mxu0 0
        %1998 = vmatpush1.bf16.msra.mxu0 %v1930
        %1999 = vmatprep.subr.bf16.mxu0 0
        %2000 = vmatpush1.bf16.msra.mxu0 %v1931
        %2001 = vmatprep.subr.bf16.mxu0 0
        %2002 = vmatpush1.bf16.msra.mxu0 %v1932
        %2003 = vmatprep.subr.bf16.mxu0 0
        %2004 = vmatpush1.bf16.msra.mxu0 %v1933
        %2005 = vmatprep.subr.bf16.mxu0 0
        %2006 = vmatpush1.bf16.msra.mxu0 %v1934
        %2007 = vmatprep.subr.bf16.mxu0 0
        %2008 = vmatpush1.bf16.msra.mxu0 %v1935
        %2009 = vmatprep.subr.bf16.mxu0 0
        %2010 = vmatpush1.bf16.msra.mxu0 %v1936
        %2011 = vmatprep.subr.bf16.mxu0 0
        %2012 = vmatpush1.bf16.msra.mxu0 %v1937
        %2013 = vmatprep.subr.bf16.mxu0 0
        %2014 = vmatpush1.bf16.msra.mxu0 %v1938
        %2015 = vmatprep.subr.bf16.mxu0 0
        %2016 = vmatpush1.bf16.msra.mxu0 %v1939
        %2017 = vmatprep.subr.bf16.mxu0 0
        %2018 = vmatpush1.bf16.msra.mxu0 %v1940
        %2019 = vmatprep.subr.bf16.mxu0 0
        %2020 = vmatpush1.bf16.msra.mxu0 %v1941
        %2021 = vmatprep.subr.bf16.mxu0 0
        %2022 = vmatpush1.bf16.msra.mxu0 %v1942
        %2023 = vmatprep.mubr.bf16.mxu0 %v1728
        %2024 = vmatmul.mubr.bf16.gmra.mrb[0].mxu0 %v1727
        %v2025 = vpop.f32.mrb[0].mxu0
        %v2026 = vadd.f32 %v1798, %v2025
        %v2027 = vpop.f32.mrb[0].mxu0
        %v2028 = vpop.f32.mrb[0].mxu0
        %v2029 = vpop.f32.mrb[0].mxu0
        %2030 = vdwg.mxu0
        %2031 = vmatprep.subr.bf16.mxu0 0
        %2032 = vmatpush1.bf16.msra.mxu0 %v1943
        %2033 = vmatprep.subr.bf16.mxu0 0
        %2034 = vmatpush1.bf16.msra.mxu0 %v1944
        %2035 = vmatprep.subr.bf16.mxu0 0
        %2036 = vmatpush1.bf16.msra.mxu0 %v1945
        %2037 = vmatprep.subr.bf16.mxu0 0
        %2038 = vmatpush1.bf16.msra.mxu0 %v1946
        %2039 = vmatprep.subr.bf16.mxu0 0
        %2040 = vmatpush1.bf16.msra.mxu0 %v1947
        %2041 = vmatprep.subr.bf16.mxu0 0
        %2042 = vmatpush1.bf16.msra.mxu0 %v1948
        %2043 = vmatprep.subr.bf16.mxu0 0
        %2044 = vmatpush1.bf16.msra.mxu0 %v1949
        %2045 = vmatprep.subr.bf16.mxu0 0
        %2046 = vmatpush1.bf16.msra.mxu0 %v1950
        %2047 = vmatprep.subr.bf16.mxu0 0
        %2048 = vmatpush1.bf16.msra.mxu0 %v1951
        %2049 = vmatprep.subr.bf16.mxu0 0
        %2050 = vmatpush1.bf16.msra.mxu0 %v1952
        %2051 = vmatprep.subr.bf16.mxu0 0
        %2052 = vmatpush1.bf16.msra.mxu0 %v1953
        %2053 = vmatprep.subr.bf16.mxu0 0
        %2054 = vmatpush1.bf16.msra.mxu0 %v1954
        %2055 = vmatprep.subr.bf16.mxu0 0
        %2056 = vmatpush1.bf16.msra.mxu0 %v1955
        %2057 = vmatprep.subr.bf16.mxu0 0
        %2058 = vmatpush1.bf16.msra.mxu0 %v1956
        %2059 = vmatprep.subr.bf16.mxu0 0
        %2060 = vmatpush1.bf16.msra.mxu0 %v1957
        %2061 = vmatprep.subr.bf16.mxu0 0
        %2062 = vmatpush1.bf16.msra.mxu0 %v1958
        %2063 = vmatprep.mubr.bf16.mxu0 %v1730
        %2064 = vmatmul.mubr.bf16.gmra.mrb[0].mxu0 %v1729
        %v2065 = vpop.f32.mrb[0].mxu0
        %v2066 = vadd.f32 %v2026, %v2065
        %v2067 = vpop.f32.mrb[0].mxu0
        %v2068 = vpop.f32.mrb[0].mxu0
        %v2069 = vpop.f32.mrb[0].mxu0
        %2070 = vdwg.mxu0
        %v2071 = vadd.f32 %v1382, %v2066
        %2072 = vst [vmem:[%s497] sm:$0xff] %v2071
        %s2073 = sand.u32 %s230, 1
        %s2074 = scalar_lea.sflag [#allocation4], %s2073
        %s2075 = sand.u32 %s230, 1
        %s2076 = smul.addr %s2075, 8
        %s2077 = scalar_lea.vmem [#allocation13], %s2076
        // Predicated region
        $region77: #{tpu_custom_call.1} parent=47 // pred_check
          %p2078 = pneg %p240
        $region78: #{tpu_custom_call.1} parent=47 // pred_check_branch
          %2080 = sbr.rel (%p2078) target = $region80
        $region79: #{tpu_custom_call.1} parent=47 // pred_region
          %s2082 = ssub.s32 128, 128
          %2083 = vsyncadd %s2074, %s2082
          %s2084 = smul.addr %s37, 128
          %s2085 = scalar_lea.hbm %s7, %s2084
          %s2087 = sshll.u32 %s2077, 4
          %s2088 = int_to_ptr.vmem [resolvable:$true] %s2087
          %2090 = dma.vmem_to_hbm [thread:$0]  %s2088, 128, %s2085, %s2074
        $region80: #{tpu_custom_call.1} parent=47 // pred_fallthru
          _
      $region48: #{tpu_custom_call.1} parent=5 // pred_fallthru
        _
      %p2091 = scmp.le.s32.totalorder 2, %s28
      // Predicated region
      $region81: #{tpu_custom_call.1} parent=5 // pred_check
        %p2092 = pneg %p2091
      $region82: #{tpu_custom_call.1} parent=5 // pred_check_branch
        %2094 = sbr.rel (%p2092) target = $region84
      $region83: #{tpu_custom_call.1} parent=5 // pred_region
        %s2095 = ssub.s32 %s28, 2
        // Predicated region
        $region85: #{tpu_custom_call.1} parent=83 // pred_check
          %p2096 = pneg %p246
        $region86: #{tpu_custom_call.1} parent=83 // pred_check_branch
          %2098 = sbr.rel (%p2096) target = $region88
        $region87: #{tpu_custom_call.1} parent=83 // pred_region
          %s2099 = sand.u32 %s231, 1
          %s2100 = scalar_lea.sflag [#allocation4], %s2099
          %s2101 = sand.u32 %s231, 1
          %s2102 = smul.addr %s2101, 8
          %s2103 = scalar_lea.vmem [#allocation13], %s2102
          %2104 = dma.done %s2100, 128
        $region88: #{tpu_custom_call.1} parent=83 // pred_fallthru
          _
      $region84: #{tpu_custom_call.1} parent=5 // pred_fallthru
        _
    $region6: #{tpu_custom_call.1} parent=1 // loop_footer
      %s32 = sadd.s32 1, %s28
    $region7: #{tpu_custom_call.1} parent=1 // loop_footer_branch
      %27 = sbr.rel target = $region3
    $region8: #{tpu_custom_call.1} parent=1 // loop_exit
      _
    %2105 = vsyncpa [#allocation3], 1
    %s2106 = scalar_lea.sflag [#allocation3], 1
    %2107 = vsyncpa %s2106, 1
    %2108 = vsyncpa [#allocation6], 1
    %s2109 = scalar_lea.sflag [#allocation6], 1
    %2110 = vsyncpa %s2109, 1
    %2111 = vsyncpa [#allocation9], 1
    %s2112 = scalar_lea.sflag [#allocation9], 1
    %2113 = vsyncpa %s2112, 1
    %2114 = vsyncpa [#allocation12], 1
    %s2115 = scalar_lea.sflag [#allocation12], 1
    %2116 = vsyncpa %s2115, 1
    %2117 = vsyncpa [#allocation4], 1
    %s2118 = scalar_lea.sflag [#allocation4], 1
    %2119 = vsyncpa %s2118, 1

</llo_original>
